<compile_context>
chip_gen: v7x
topology: tpu7x:2x2x1
jax: 0.10.0
libtpu: 0.0.40
codegen_flags: <defaults>
</compile_context>

<pallas_src>
import functools
import math

import jax
import jax.numpy as jnp
from jax.experimental import pallas as pl
from jax.experimental.pallas import tpu as pltpu

LN_EPS = 1e-5


def _mxu_dot(a, b):
    """bf16 MXU operands, f32 accumulation."""
    return jnp.dot(a.astype(jnp.bfloat16), b.astype(jnp.bfloat16),
                   preferred_element_type=jnp.float32)


def _layer_norm(x, w, b):
    mean = jnp.mean(x, axis=-1, keepdims=True)
    var = jnp.mean((x - mean) ** 2, axis=-1, keepdims=True)
    return (x - mean) * jax.lax.rsqrt(var + LN_EPS) * w + b


# ---------------------------------------------------------------------------
# Kernels
# ---------------------------------------------------------------------------
def fused_encoder_kernel(x_emb_ref, pe_ref, mask_ref,
                         wqkv_ref, bqkv_ref,          # [1, D, 3D] bf16, [1, 1, 3D]
                         wo_ref, bo_ref,              # [1, D, D]  bf16, [1, 1, D]
                         ln1w_ref, ln1b_ref,          # [1, 1, D]
                         w1_ref, b1_ref,              # [1, D, F]  bf16, [1, 1, F]
                         w2_ref, b2_ref,              # [1, F, D]  bf16, [1, 1, D]
                         ln2w_ref, ln2b_ref,          # [1, 1, D]
                         out_ref, act_ref, *, nhead, emb_scale):
    layer = pl.program_id(1)
    n_layers = pl.num_programs(1)
    Bt, S, D = act_ref.shape
    H = nhead
    dh = D // H
    R = Bt * S
    att_scale = 1.0 / math.sqrt(dh)

    # Layer 0: embedding scale + positional encoding into the resident f32
    # activation scratch (stays in VMEM for the entire layer stack).
    @pl.when(layer == 0)
    def _():
        act_ref[...] = (x_emb_ref[...].astype(jnp.float32) * emb_scale
                        + pe_ref[...][None, :, :])

    x = act_ref[...].reshape(R, D)                       # [R, D] f32
    mask = mask_ref[...].astype(jnp.float32)             # [S, S] additive

    # ---- fused QKV projection: one wide, lane-dense MXU matmul on all rows ----
    qkv = _mxu_dot(x, wqkv_ref[0]) + bqkv_ref[0]         # [R, 3D] f32
    qkv_b = qkv.reshape(Bt, S, 3 * D)

    # ---- multi-head self attention: batched einsum contractions (no .T),
    #      single head-stacked softmax pass ----
    # TODO(synk): for S in the 1-4K range this should become a flash-style
    # KV-block streaming loop instead of materializing full [S,S] scores.
    s_heads = []
    for h in range(H):
        q_h = qkv_b[:, :, h * dh:(h + 1) * dh].astype(jnp.bfloat16)
        k_h = qkv_b[:, :, D + h * dh:D + (h + 1) * dh].astype(jnp.bfloat16)
        s_heads.append(jnp.einsum('bqd,bkd->bqk', q_h, k_h,
                                  preferred_element_type=jnp.float32))
    s = (jnp.stack(s_heads, axis=1) * att_scale).reshape(Bt * H, S, S)
    s = s + mask[None]                                   # [Bt*H, S, S]
    m = jnp.max(s, axis=-1, keepdims=True)
    e = jnp.exp(s - m)
    denom = jnp.sum(e, axis=-1, keepdims=True)
    p = (e * pl.reciprocal(denom, approx=True)).reshape(Bt, H, S, S)
    p = p.astype(jnp.bfloat16)

    ctx_heads = []
    for h in range(H):
        v_h = qkv_b[:, :, 2 * D + h * dh:2 * D + (h + 1) * dh].astype(jnp.bfloat16)
        ctx_heads.append(jnp.einsum('bqk,bkd->bqd', p[:, h], v_h,
                                    preferred_element_type=jnp.float32))
    ctx = jnp.concatenate(ctx_heads, axis=-1).reshape(R, D)   # [R, D]

    # ---- single D-wide output projection on all rows ----
    attn = _mxu_dot(ctx, wo_ref[0]) + bo_ref[0]               # [R, D]

    # TODO(synk): dropout is identity (eval mode); training-time RNG dropout not implemented.
    # ---- residual + layernorm 1 (f32) ----
    y = _layer_norm(x + attn, ln1w_ref[0], ln1b_ref[0])

    # ---- feed-forward (ReLU), bf16 MXU operands / f32 accumulate ----
    hidden = jnp.maximum(_mxu_dot(y, w1_ref[0]) + b1_ref[0], 0.0)
    ff = _mxu_dot(hidden, w2_ref[0]) + b2_ref[0]

    # ---- residual + layernorm 2 ----
    z = _layer_norm(y + ff, ln2w_ref[0], ln2b_ref[0]).reshape(Bt, S, D)
    act_ref[...] = z

    @pl.when(layer == n_layers - 1)
    def _():
        out_ref[...] = z.astype(out_ref.dtype)


def decoder_kernel(x_ref, w_ref, b_ref, out_ref):
    # x: [tm, D] bf16, w: [D, tn] bf16 (tn multiple of 128 -> lane-dense stores)
    acc = jnp.dot(x_ref[...], w_ref[...],
                  preferred_element_type=jnp.float32) + b_ref[...]
    out_ref[...] = acc.astype(out_ref.dtype)


# ---------------------------------------------------------------------------
# Tiling heuristics
# ---------------------------------------------------------------------------
def _pick_bt(batch, seq):
    """Batch elements per encoder block: ~256 rows per block, but keep >= 2
    parallel batch blocks when the batch allows (v7x has 2 TensorCores)."""
    target_rows = 256
    bt = max(1, min(batch, target_rows // max(seq, 1)))
    while batch % bt:
        bt -= 1
    if bt == batch and batch > 1:
        for d in range(batch // 2, 0, -1):
            if batch % d == 0:
                bt = d
                break
    return bt


def _pick_tile(n, candidates):
    for c in candidates:
        if n % c == 0:
            return c
    return n


# ---------------------------------------------------------------------------
# Wrapper
# ---------------------------------------------------------------------------
def transformer_forward(src_tokens, src_mask, params, *, nhead, ntoken):
    """src_tokens: [S, B] int32, src_mask: [S, S] float32 (additive).
    Returns logits of shape [S, B, ntoken] (PyTorch convention)."""
    S, B = src_tokens.shape
    D = params["emb"].shape[1]
    L = params["wqkv"].shape[0]
    F = params["w1"].shape[2]
    ntoken_pad = params["dec_w_t"].shape[1]
    assert D % nhead == 0

    # embedding lookup (gather) in plain-JAX glue; batch-first layout [B, S, D]
    x_emb = jnp.take(params["emb"], src_tokens.T, axis=0)
    pe = params["pe"][:S]

    Bt = _pick_bt(B, S)
    const2 = lambda b, l: (0, 0)

    def wspec(shape):
        return pl.BlockSpec(shape, lambda b, l: (l, 0, 0))

    # --- fused PE + all encoder layers in one pallas_call ---
    enc = pl.pallas_call(
        functools.partial(fused_encoder_kernel, nhead=nhead,
                          emb_scale=math.sqrt(D)),
        out_shape=jax.ShapeDtypeStruct((B, S, D), jnp.bfloat16),
        grid=(B // Bt, L),
        in_specs=[
            pl.BlockSpec((Bt, S, D), lambda b, l: (b, 0, 0)),   # token embeddings
            pl.BlockSpec((S, D), const2),                       # positional encoding
            pl.BlockSpec((S, S), const2),                       # additive mask
            wspec((1, D, 3 * D)), wspec((1, 1, 3 * D)),         # wqkv, bqkv
            wspec((1, D, D)), wspec((1, 1, D)),                 # wo, bo
            wspec((1, 1, D)), wspec((1, 1, D)),                 # ln1 w, b
            wspec((1, D, F)), wspec((1, 1, F)),                 # w1, b1
            wspec((1, F, D)), wspec((1, 1, D)),                 # w2, b2
            wspec((1, 1, D)), wspec((1, 1, D)),                 # ln2 w, b
        ],
        out_specs=pl.BlockSpec((Bt, S, D), lambda b, l: (b, 0, 0)),
        scratch_shapes=[pltpu.VMEM((Bt, S, D), jnp.float32)],   # resident activation
        compiler_params=pltpu.CompilerParams(
            dimension_semantics=("parallel", "arbitrary"),
            vmem_limit_bytes=32 * 1024 * 1024),
    )(x_emb, pe, src_mask.astype(jnp.float32),
      params["wqkv"], params["bqkv"], params["wo"], params["bo"],
      params["ln1w"], params["ln1b"],
      params["w1"], params["b1"], params["w2"], params["b2"],
      params["ln2w"], params["ln2b"])

    # --- decoder: (row_block, vocab_block) parallel grid, vocab padded to 128 ---
    rows = B * S
    x2 = enc.reshape(rows, D)                                   # bf16 activations
    tm = _pick_tile(rows, (256, 128, 64, 32, 16, 8))
    tn = _pick_tile(ntoken_pad, (512, 256, 128))
    # ensure >= 2 parallel blocks when possible so both v7x TensorCores get work
    if (rows // tm) * (ntoken_pad // tn) < 2 and tm % 16 == 0 and rows % (tm // 2) == 0:
        tm //= 2

    logits_pad = pl.pallas_call(
        decoder_kernel,
        out_shape=jax.ShapeDtypeStruct((rows, ntoken_pad), jnp.float32),
        grid=(rows // tm, ntoken_pad // tn),
        in_specs=[pl.BlockSpec((tm, D), lambda i, j: (i, 0)),
                  pl.BlockSpec((D, tn), lambda i, j: (0, j)),
                  pl.BlockSpec((1, tn), lambda i, j: (0, j))],
        out_specs=pl.BlockSpec((tm, tn), lambda i, j: (i, j)),
        compiler_params=pltpu.CompilerParams(
            dimension_semantics=("parallel", "parallel"),
            vmem_limit_bytes=32 * 1024 * 1024),
    )(x2, params["dec_w_t"], params["dec_b"])

    logits = logits_pad.reshape(B, S, ntoken_pad)[:, :, :ntoken]
    return logits.transpose(1, 0, 2)                            # -> [S, B, ntoken]


# ---------------------------------------------------------------------------
# Deterministic parameter initialization (shapes match the PyTorch module)
# ---------------------------------------------------------------------------
def init_params(key, ntoken, d_model, nhead, d_hid, nlayers, max_len=64,
                w_dtype=jnp.bfloat16):
    keys = jax.random.split(key, 2 + nlayers)
    initrange = 0.1

    def u(k, shape, scale):
        return jax.random.uniform(k, shape, jnp.float32, -scale, scale)

    emb = u(keys[0], (ntoken, d_model), initrange)              # nn.Embedding weight
    dec_w = u(keys[1], (ntoken, d_model), initrange)            # decoder Linear weight
    ntoken_pad = ((ntoken + 127) // 128) * 128                  # lane-dense vocab
    dec_w_t = jnp.zeros((d_model, ntoken_pad), jnp.float32).at[:, :ntoken].set(dec_w.T)
    dec_b = jnp.zeros((1, ntoken_pad), jnp.float32)

    wqkv, bqkv, wo, bo = [], [], [], []
    ln1w, ln1b, ln2w, ln2b = [], [], [], []
    w1, b1, w2, b2 = [], [], [], []
    for li in range(nlayers):
        lk = jax.random.split(keys[2 + li], 6)
        s_in = 1.0 / math.sqrt(d_model)
        s_hid = 1.0 / math.sqrt(d_hid)
        in_proj = u(lk[0], (3 * d_model, d_model), s_in)        # MHA in_proj_weight [3D, D]
        wqkv.append(in_proj.T)                                  # [D, 3D], q|k|v columns
        bqkv.append(jnp.zeros((1, 3 * d_model), jnp.float32))
        wo.append(u(lk[1], (d_model, d_model), s_in).T)         # out_proj weight [D, D]
        bo.append(jnp.zeros((1, d_model), jnp.float32))
        ln1w.append(jnp.ones((1, d_model), jnp.float32))
        ln1b.append(jnp.zeros((1, d_model), jnp.float32))
        w1.append(u(lk[2], (d_hid, d_model), s_in).T)           # [D, F]
        b1.append(u(lk[3], (1, d_hid), s_in))
        w2.append(u(lk[4], (d_model, d_hid), s_hid).T)          # [F, D]
        b2.append(u(lk[5], (1, d_model), s_hid))
        ln2w.append(jnp.ones((1, d_model), jnp.float32))
        ln2b.append(jnp.zeros((1, d_model), jnp.float32))

    def stack(xs, dt=jnp.float32):
        return jnp.stack(xs).astype(dt)

    # sinusoidal positional encoding (matches PositionalEncoding buffer)
    position = jnp.arange(max_len, dtype=jnp.float32)[:, None]
    div_term = jnp.exp(jnp.arange(0, d_model, 2, dtype=jnp.float32)
                       * (-math.log(10000.0) / d_model))
    pe = jnp.zeros((max_len, d_model), jnp.float32)
    pe = pe.at[:, 0::2].set(jnp.sin(position * div_term))
    pe = pe.at[:, 1::2].set(jnp.cos(position * div_term))

    return dict(
        emb=emb, pe=pe,
        dec_w_t=dec_w_t.astype(w_dtype), dec_b=dec_b,
        wqkv=stack(wqkv, w_dtype), bqkv=stack(bqkv),
        wo=stack(wo, w_dtype), bo=stack(bo),
        ln1w=stack(ln1w), ln1b=stack(ln1b),
        w1=stack(w1, w_dtype), b1=stack(b1),
        w2=stack(w2, w_dtype), b2=stack(b2),
        ln2w=stack(ln2w), ln2b=stack(ln2b),
    )


if __name__ == "__main__":
    NTOKEN, D_MODEL, NHEAD, D_HID, NLAYERS = 100, 64, 4, 128, 2
    S, B = 16, 4

    key = jax.random.PRNGKey(0)
    pkey, tkey = jax.random.split(key)
    params = init_params(pkey, NTOKEN, D_MODEL, NHEAD, D_HID, NLAYERS, max_len=64)

    src = jax.random.randint(tkey, (S, B), 0, NTOKEN, dtype=jnp.int32)
    causal = jnp.triu(jnp.ones((S, S), dtype=bool), k=1)
    src_mask = jnp.where(causal, -1e9, 0.0).astype(jnp.float32)  # additive float mask

    out = transformer_forward(src, src_mask, params, nhead=NHEAD, ntoken=NTOKEN)
    out = jax.block_until_ready(out)
    assert out.shape == (S, B, NTOKEN)
    assert bool(jnp.all(jnp.isfinite(out)))
    print("KERNEL_OK")
</pallas_src>

<mosaic_0001>
module attributes {stable_mosaic.version = 11 : i64} {
  func.func @fused_encoder_kernel(%arg0: i32, %arg1: i32, %arg2: memref<2x16x64xf32, #tpu.memory_space<vmem>>, %arg3: memref<16x64xf32, #tpu.memory_space<vmem>>, %arg4: memref<16x16xf32, #tpu.memory_space<vmem>>, %arg5: memref<1x64x192xbf16, #tpu.memory_space<vmem>>, %arg6: memref<1x1x192xf32, #tpu.memory_space<vmem>>, %arg7: memref<1x64x64xbf16, #tpu.memory_space<vmem>>, %arg8: memref<1x1x64xf32, #tpu.memory_space<vmem>>, %arg9: memref<1x1x64xf32, #tpu.memory_space<vmem>>, %arg10: memref<1x1x64xf32, #tpu.memory_space<vmem>>, %arg11: memref<1x64x128xbf16, #tpu.memory_space<vmem>>, %arg12: memref<1x1x128xf32, #tpu.memory_space<vmem>>, %arg13: memref<1x128x64xbf16, #tpu.memory_space<vmem>>, %arg14: memref<1x1x64xf32, #tpu.memory_space<vmem>>, %arg15: memref<1x1x64xf32, #tpu.memory_space<vmem>>, %arg16: memref<1x1x64xf32, #tpu.memory_space<vmem>>, %arg17: memref<2x16x64xbf16, #tpu.memory_space<vmem>>, %arg18: memref<2x16x64xf32, #tpu.memory_space<vmem>>) attributes {dimension_semantics = [#tpu.dimension_semantics<parallel>, #tpu.dimension_semantics<arbitrary>], iteration_bounds = array<i64: 2, 2>, scalar_prefetch = 0 : i64, scratch_operands = 1 : i64, tpu.core_type = #tpu.core_type<tc>, window_params = [{transform_indices = @transform_0, window_bounds = array<i64: 2, 16, 64>}, {pipeline_mode = #tpu.pipeline_mode<synchronous>, transform_indices = @transform_1, window_bounds = array<i64: 16, 64>}, {pipeline_mode = #tpu.pipeline_mode<synchronous>, transform_indices = @transform_2, window_bounds = array<i64: 16, 16>}, {transform_indices = @transform_3, window_bounds = array<i64: 1, 64, 192>}, {transform_indices = @transform_4, window_bounds = array<i64: 1, 1, 192>}, {transform_indices = @transform_5, window_bounds = array<i64: 1, 64, 64>}, {transform_indices = @transform_6, window_bounds = array<i64: 1, 1, 64>}, {transform_indices = @transform_7, window_bounds = array<i64: 1, 1, 64>}, {transform_indices = @transform_8, window_bounds = array<i64: 1, 1, 64>}, {transform_indices = @transform_9, window_bounds = array<i64: 1, 64, 128>}, {transform_indices = @transform_10, window_bounds = array<i64: 1, 1, 128>}, {transform_indices = @transform_11, window_bounds = array<i64: 1, 128, 64>}, {transform_indices = @transform_12, window_bounds = array<i64: 1, 1, 64>}, {transform_indices = @transform_13, window_bounds = array<i64: 1, 1, 64>}, {transform_indices = @transform_14, window_bounds = array<i64: 1, 1, 64>}, {transform_indices = @transform_15, window_bounds = array<i64: 2, 16, 64>}]} {
    %c0_i32 = arith.constant 0 : i32
    %0 = arith.cmpi eq, %arg1, %c0_i32 : i32
    %1 = arith.extui %0 : i1 to i32
    %c0_i32_0 = arith.constant 0 : i32
    %2 = arith.cmpi ne, %1, %c0_i32_0 : i32
    scf.if %2 {
      %c0_70 = arith.constant 0 : index
      %c0_71 = arith.constant 0 : index
      %c0_72 = arith.constant 0 : index
      %165 = vector.load %arg2[%c0_70, %c0_71, %c0_72] : memref<2x16x64xf32, #tpu.memory_space<vmem>>, vector<2x16x64xf32>
      %cst_73 = arith.constant 8.000000e+00 : f32
      %166 = vector.broadcast %cst_73 : f32 to vector<2x16x64xf32>
      %167 = arith.mulf %165, %166 : vector<2x16x64xf32>
      %c0_74 = arith.constant 0 : index
      %c0_75 = arith.constant 0 : index
      %168 = vector.load %arg3[%c0_74, %c0_75] : memref<16x64xf32, #tpu.memory_space<vmem>>, vector<16x64xf32>
      %169 = vector.shape_cast %168 : vector<16x64xf32> to vector<1x16x64xf32>
      %170 = vector.broadcast %169 : vector<1x16x64xf32> to vector<2x16x64xf32>
      %171 = arith.addf %167, %170 : vector<2x16x64xf32>
      %c0_76 = arith.constant 0 : index
      %c0_77 = arith.constant 0 : index
      %c0_78 = arith.constant 0 : index
      %172 = vector.load %arg18[%c0_76, %c0_77, %c0_78] : memref<2x16x64xf32, #tpu.memory_space<vmem>>, vector<2x16x64xf32>
      tpu.vector_store %arg18[%c0_76, %c0_77, %c0_78], %171 {strides = array<i32>} : memref<2x16x64xf32, #tpu.memory_space<vmem>>, vector<2x16x64xf32>,
    } else {
    }
    %c0 = arith.constant 0 : index
    %c0_1 = arith.constant 0 : index
    %c0_2 = arith.constant 0 : index
    %3 = vector.load %arg18[%c0, %c0_1, %c0_2] : memref<2x16x64xf32, #tpu.memory_space<vmem>>, vector<2x16x64xf32>
    %4 = vector.shape_cast %3 : vector<2x16x64xf32> to vector<32x64xf32>
    %c0_3 = arith.constant 0 : index
    %c0_4 = arith.constant 0 : index
    %5 = vector.load %arg4[%c0_3, %c0_4] : memref<16x16xf32, #tpu.memory_space<vmem>>, vector<16x16xf32>
    %c0_5 = arith.constant 0 : index
    %c0_6 = arith.constant 0 : index
    %c0_7 = arith.constant 0 : index
    %6 = vector.load %arg5[%c0_5, %c0_6, %c0_7] : memref<1x64x192xbf16, #tpu.memory_space<vmem>>, vector<1x64x192xbf16>
    %7 = vector.shape_cast %6 : vector<1x64x192xbf16> to vector<64x192xbf16>
    %8 = arith.truncf %4 : vector<32x64xf32> to vector<32x64xbf16>
    %cst = arith.constant dense<0.000000e+00> : vector<32x192xf32>
    %9 = tpu.matmul %8, %7, %cst {dimension_numbers = #tpu.dot_dimension_numbers<[1], [0], [0], [1], [0, 0, 1, 1], [], []>} : vector<32x64xbf16>, vector<64x192xbf16>, vector<32x192xf32> -> vector<32x192xf32>
    %c0_8 = arith.constant 0 : index
    %c0_9 = arith.constant 0 : index
    %c0_10 = arith.constant 0 : index
    %10 = vector.load %arg6[%c0_8, %c0_9, %c0_10] : memref<1x1x192xf32, #tpu.memory_space<vmem>>, vector<1x1x192xf32>
    %11 = vector.shape_cast %10 : vector<1x1x192xf32> to vector<1x192xf32>
    %12 = vector.broadcast %11 : vector<1x192xf32> to vector<32x192xf32>
    %13 = arith.addf %9, %12 : vector<32x192xf32>
    %14 = vector.shape_cast %13 : vector<32x192xf32> to vector<2x16x192xf32>
    %15 = vector.extract_strided_slice %14 {offsets = [0, 0, 0], sizes = [2, 16, 16], strides = [1, 1, 1]} : vector<2x16x192xf32> to vector<2x16x16xf32>
    %16 = arith.truncf %15 : vector<2x16x16xf32> to vector<2x16x16xbf16>
    %17 = vector.extract_strided_slice %14 {offsets = [0, 0, 64], sizes = [2, 16, 16], strides = [1, 1, 1]} : vector<2x16x192xf32> to vector<2x16x16xf32>
    %18 = arith.truncf %17 : vector<2x16x16xf32> to vector<2x16x16xbf16>
    "tpu.trace_start"() <{level = 10 : i32, message = "bqd,bkd->bqk"}> : () -> ()
    %cst_11 = arith.constant dense<0.000000e+00> : vector<2x16x16xf32>
    %19 = tpu.matmul %16, %18, %cst_11 {dimension_numbers = #tpu.dot_dimension_numbers<[2], [2], [1], [1], [0, 0, 0, 1, 1, 1], [0], [0]>} : vector<2x16x16xbf16>, vector<2x16x16xbf16>, vector<2x16x16xf32> -> vector<2x16x16xf32>
    "tpu.trace_stop"() : () -> ()
    %20 = vector.extract_strided_slice %14 {offsets = [0, 0, 16], sizes = [2, 16, 16], strides = [1, 1, 1]} : vector<2x16x192xf32> to vector<2x16x16xf32>
    %21 = arith.truncf %20 : vector<2x16x16xf32> to vector<2x16x16xbf16>
    %22 = vector.extract_strided_slice %14 {offsets = [0, 0, 80], sizes = [2, 16, 16], strides = [1, 1, 1]} : vector<2x16x192xf32> to vector<2x16x16xf32>
    %23 = arith.truncf %22 : vector<2x16x16xf32> to vector<2x16x16xbf16>
    "tpu.trace_start"() <{level = 10 : i32, message = "bqd,bkd->bqk"}> : () -> ()
    %cst_12 = arith.constant dense<0.000000e+00> : vector<2x16x16xf32>
    %24 = tpu.matmul %21, %23, %cst_12 {dimension_numbers = #tpu.dot_dimension_numbers<[2], [2], [1], [1], [0, 0, 0, 1, 1, 1], [0], [0]>} : vector<2x16x16xbf16>, vector<2x16x16xbf16>, vector<2x16x16xf32> -> vector<2x16x16xf32>
    "tpu.trace_stop"() : () -> ()
    %25 = vector.extract_strided_slice %14 {offsets = [0, 0, 32], sizes = [2, 16, 16], strides = [1, 1, 1]} : vector<2x16x192xf32> to vector<2x16x16xf32>
    %26 = arith.truncf %25 : vector<2x16x16xf32> to vector<2x16x16xbf16>
    %27 = vector.extract_strided_slice %14 {offsets = [0, 0, 96], sizes = [2, 16, 16], strides = [1, 1, 1]} : vector<2x16x192xf32> to vector<2x16x16xf32>
    %28 = arith.truncf %27 : vector<2x16x16xf32> to vector<2x16x16xbf16>
    "tpu.trace_start"() <{level = 10 : i32, message = "bqd,bkd->bqk"}> : () -> ()
    %cst_13 = arith.constant dense<0.000000e+00> : vector<2x16x16xf32>
    %29 = tpu.matmul %26, %28, %cst_13 {dimension_numbers = #tpu.dot_dimension_numbers<[2], [2], [1], [1], [0, 0, 0, 1, 1, 1], [0], [0]>} : vector<2x16x16xbf16>, vector<2x16x16xbf16>, vector<2x16x16xf32> -> vector<2x16x16xf32>
    "tpu.trace_stop"() : () -> ()
    %30 = vector.extract_strided_slice %14 {offsets = [0, 0, 48], sizes = [2, 16, 16], strides = [1, 1, 1]} : vector<2x16x192xf32> to vector<2x16x16xf32>
    %31 = arith.truncf %30 : vector<2x16x16xf32> to vector<2x16x16xbf16>
    %32 = vector.extract_strided_slice %14 {offsets = [0, 0, 112], sizes = [2, 16, 16], strides = [1, 1, 1]} : vector<2x16x192xf32> to vector<2x16x16xf32>
    %33 = arith.truncf %32 : vector<2x16x16xf32> to vector<2x16x16xbf16>
    "tpu.trace_start"() <{level = 10 : i32, message = "bqd,bkd->bqk"}> : () -> ()
    %cst_14 = arith.constant dense<0.000000e+00> : vector<2x16x16xf32>
    %34 = tpu.matmul %31, %33, %cst_14 {dimension_numbers = #tpu.dot_dimension_numbers<[2], [2], [1], [1], [0, 0, 0, 1, 1, 1], [0], [0]>} : vector<2x16x16xbf16>, vector<2x16x16xbf16>, vector<2x16x16xf32> -> vector<2x16x16xf32>
    "tpu.trace_stop"() : () -> ()
    %35 = vector.shape_cast %19 : vector<2x16x16xf32> to vector<2x1x16x16xf32>
    %36 = vector.shape_cast %24 : vector<2x16x16xf32> to vector<2x1x16x16xf32>
    %37 = vector.shape_cast %29 : vector<2x16x16xf32> to vector<2x1x16x16xf32>
    %38 = vector.shape_cast %34 : vector<2x16x16xf32> to vector<2x1x16x16xf32>
    %39 = tpu.concatenate %35, %36, %37, %38 in 1 : vector<2x1x16x16xf32>, vector<2x1x16x16xf32>, vector<2x1x16x16xf32>, vector<2x1x16x16xf32> -> vector<2x4x16x16xf32>
    %cst_15 = arith.constant 2.500000e-01 : f32
    %40 = vector.broadcast %cst_15 : f32 to vector<2x4x16x16xf32>
    %41 = arith.mulf %39, %40 : vector<2x4x16x16xf32>
    %42 = vector.shape_cast %41 : vector<2x4x16x16xf32> to vector<8x16x16xf32>
    %43 = vector.shape_cast %5 : vector<16x16xf32> to vector<1x16x16xf32>
    %44 = vector.broadcast %43 : vector<1x16x16xf32> to vector<8x16x16xf32>
    %45 = arith.addf %42, %44 : vector<8x16x16xf32>
    %cst_16 = arith.constant dense<0xFF800000> : vector<8x16xf32>
    %46 = vector.multi_reduction <maximumf>, %45, %cst_16 [2] : vector<8x16x16xf32> to vector<8x16xf32>
    %47 = vector.shape_cast %46 : vector<8x16xf32> to vector<8x16x1xf32>
    %48 = vector.broadcast %47 : vector<8x16x1xf32> to vector<8x16x16xf32>
    %49 = arith.subf %45, %48 : vector<8x16x16xf32>
    %50 = math.exp %49 : vector<8x16x16xf32>
    %cst_17 = arith.constant dense<0.000000e+00> : vector<8x16xf32>
    %51 = vector.multi_reduction <add>, %50, %cst_17 [2] : vector<8x16x16xf32> to vector<8x16xf32>
    %52 = vector.shape_cast %51 : vector<8x16xf32> to vector<8x16x1xf32>
    %53 = tpu.reciprocal %52 {approx = true} : vector<8x16x1xf32> -> vector<8x16x1xf32>
    %54 = vector.broadcast %53 : vector<8x16x1xf32> to vector<8x16x16xf32>
    %55 = arith.mulf %50, %54 : vector<8x16x16xf32>
    %56 = vector.shape_cast %55 : vector<8x16x16xf32> to vector<2x4x16x16xf32>
    %57 = arith.truncf %56 : vector<2x4x16x16xf32> to vector<2x4x16x16xbf16>
    %58 = vector.extract_strided_slice %14 {offsets = [0, 0, 128], sizes = [2, 16, 16], strides = [1, 1, 1]} : vector<2x16x192xf32> to vector<2x16x16xf32>
    %59 = arith.truncf %58 : vector<2x16x16xf32> to vector<2x16x16xbf16>
    %60 = vector.extract_strided_slice %57 {offsets = [0, 0, 0, 0], sizes = [2, 1, 16, 16], strides = [1, 1, 1, 1]} : vector<2x4x16x16xbf16> to vector<2x1x16x16xbf16>
    %61 = vector.shape_cast %60 : vector<2x1x16x16xbf16> to vector<2x16x16xbf16>
    "tpu.trace_start"() <{level = 10 : i32, message = "bqk,bkd->bqd"}> : () -> ()
    %cst_18 = arith.constant dense<0.000000e+00> : vector<2x16x16xf32>
    %62 = tpu.matmul %61, %59, %cst_18 {dimension_numbers = #tpu.dot_dimension_numbers<[2], [1], [1], [2], [0, 0, 0, 1, 1, 2], [0], [0]>} : vector<2x16x16xbf16>, vector<2x16x16xbf16>, vector<2x16x16xf32> -> vector<2x16x16xf32>
    "tpu.trace_stop"() : () -> ()
    %63 = vector.extract_strided_slice %14 {offsets = [0, 0, 144], sizes = [2, 16, 16], strides = [1, 1, 1]} : vector<2x16x192xf32> to vector<2x16x16xf32>
    %64 = arith.truncf %63 : vector<2x16x16xf32> to vector<2x16x16xbf16>
    %65 = vector.extract_strided_slice %57 {offsets = [0, 1, 0, 0], sizes = [2, 1, 16, 16], strides = [1, 1, 1, 1]} : vector<2x4x16x16xbf16> to vector<2x1x16x16xbf16>
    %66 = vector.shape_cast %65 : vector<2x1x16x16xbf16> to vector<2x16x16xbf16>
    "tpu.trace_start"() <{level = 10 : i32, message = "bqk,bkd->bqd"}> : () -> ()
    %cst_19 = arith.constant dense<0.000000e+00> : vector<2x16x16xf32>
    %67 = tpu.matmul %66, %64, %cst_19 {dimension_numbers = #tpu.dot_dimension_numbers<[2], [1], [1], [2], [0, 0, 0, 1, 1, 2], [0], [0]>} : vector<2x16x16xbf16>, vector<2x16x16xbf16>, vector<2x16x16xf32> -> vector<2x16x16xf32>
    "tpu.trace_stop"() : () -> ()
    %68 = vector.extract_strided_slice %14 {offsets = [0, 0, 160], sizes = [2, 16, 16], strides = [1, 1, 1]} : vector<2x16x192xf32> to vector<2x16x16xf32>
    %69 = arith.truncf %68 : vector<2x16x16xf32> to vector<2x16x16xbf16>
    %70 = vector.extract_strided_slice %57 {offsets = [0, 2, 0, 0], sizes = [2, 1, 16, 16], strides = [1, 1, 1, 1]} : vector<2x4x16x16xbf16> to vector<2x1x16x16xbf16>
    %71 = vector.shape_cast %70 : vector<2x1x16x16xbf16> to vector<2x16x16xbf16>
    "tpu.trace_start"() <{level = 10 : i32, message = "bqk,bkd->bqd"}> : () -> ()
    %cst_20 = arith.constant dense<0.000000e+00> : vector<2x16x16xf32>
    %72 = tpu.matmul %71, %69, %cst_20 {dimension_numbers = #tpu.dot_dimension_numbers<[2], [1], [1], [2], [0, 0, 0, 1, 1, 2], [0], [0]>} : vector<2x16x16xbf16>, vector<2x16x16xbf16>, vector<2x16x16xf32> -> vector<2x16x16xf32>
    "tpu.trace_stop"() : () -> ()
    %73 = vector.extract_strided_slice %14 {offsets = [0, 0, 176], sizes = [2, 16, 16], strides = [1, 1, 1]} : vector<2x16x192xf32> to vector<2x16x16xf32>
    %74 = arith.truncf %73 : vector<2x16x16xf32> to vector<2x16x16xbf16>
    %75 = vector.extract_strided_slice %57 {offsets = [0, 3, 0, 0], sizes = [2, 1, 16, 16], strides = [1, 1, 1, 1]} : vector<2x4x16x16xbf16> to vector<2x1x16x16xbf16>
    %76 = vector.shape_cast %75 : vector<2x1x16x16xbf16> to vector<2x16x16xbf16>
    "tpu.trace_start"() <{level = 10 : i32, message = "bqk,bkd->bqd"}> : () -> ()
    %cst_21 = arith.constant dense<0.000000e+00> : vector<2x16x16xf32>
    %77 = tpu.matmul %76, %74, %cst_21 {dimension_numbers = #tpu.dot_dimension_numbers<[2], [1], [1], [2], [0, 0, 0, 1, 1, 2], [0], [0]>} : vector<2x16x16xbf16>, vector<2x16x16xbf16>, vector<2x16x16xf32> -> vector<2x16x16xf32>
    "tpu.trace_stop"() : () -> ()
    %78 = tpu.concatenate %62, %67, %72, %77 in 2 : vector<2x16x16xf32>, vector<2x16x16xf32>, vector<2x16x16xf32>, vector<2x16x16xf32> -> vector<2x16x64xf32>
    %79 = vector.shape_cast %78 : vector<2x16x64xf32> to vector<32x64xf32>
    %c0_22 = arith.constant 0 : index
    %c0_23 = arith.constant 0 : index
    %c0_24 = arith.constant 0 : index
    %80 = vector.load %arg7[%c0_22, %c0_23, %c0_24] : memref<1x64x64xbf16, #tpu.memory_space<vmem>>, vector<1x64x64xbf16>
    %81 = vector.shape_cast %80 : vector<1x64x64xbf16> to vector<64x64xbf16>
    %82 = arith.truncf %79 : vector<32x64xf32> to vector<32x64xbf16>
    %cst_25 = arith.constant dense<0.000000e+00> : vector<32x64xf32>
    %83 = tpu.matmul %82, %81, %cst_25 {dimension_numbers = #tpu.dot_dimension_numbers<[1], [0], [0], [1], [0, 0, 1, 1], [], []>} : vector<32x64xbf16>, vector<64x64xbf16>, vector<32x64xf32> -> vector<32x64xf32>
    %c0_26 = arith.constant 0 : index
    %c0_27 = arith.constant 0 : index
    %c0_28 = arith.constant 0 : index
    %84 = vector.load %arg8[%c0_26, %c0_27, %c0_28] : memref<1x1x64xf32, #tpu.memory_space<vmem>>, vector<1x1x64xf32>
    %85 = vector.shape_cast %84 : vector<1x1x64xf32> to vector<1x64xf32>
    %86 = vector.broadcast %85 : vector<1x64xf32> to vector<32x64xf32>
    %87 = arith.addf %83, %86 : vector<32x64xf32>
    %88 = arith.addf %4, %87 : vector<32x64xf32>
    %c0_29 = arith.constant 0 : index
    %c0_30 = arith.constant 0 : index
    %c0_31 = arith.constant 0 : index
    %89 = vector.load %arg9[%c0_29, %c0_30, %c0_31] : memref<1x1x64xf32, #tpu.memory_space<vmem>>, vector<1x1x64xf32>
    %90 = vector.shape_cast %89 : vector<1x1x64xf32> to vector<1x64xf32>
    %c0_32 = arith.constant 0 : index
    %c0_33 = arith.constant 0 : index
    %c0_34 = arith.constant 0 : index
    %91 = vector.load %arg10[%c0_32, %c0_33, %c0_34] : memref<1x1x64xf32, #tpu.memory_space<vmem>>, vector<1x1x64xf32>
    %92 = vector.shape_cast %91 : vector<1x1x64xf32> to vector<1x64xf32>
    %cst_35 = arith.constant dense<0.000000e+00> : vector<32xf32>
    %93 = vector.multi_reduction <add>, %88, %cst_35 [1] : vector<32x64xf32> to vector<32xf32>
    %94 = vector.shape_cast %93 : vector<32xf32> to vector<32x1xf32>
    %cst_36 = arith.constant 6.400000e+01 : f32
    %95 = vector.broadcast %cst_36 : f32 to vector<32x1xf32>
    %96 = arith.divf %94, %95 : vector<32x1xf32>
    %97 = vector.broadcast %96 : vector<32x1xf32> to vector<32x64xf32>
    %98 = arith.subf %88, %97 : vector<32x64xf32>
    %99 = arith.mulf %98, %98 : vector<32x64xf32>
    %cst_37 = arith.constant dense<0.000000e+00> : vector<32xf32>
    %100 = vector.multi_reduction <add>, %99, %cst_37 [1] : vector<32x64xf32> to vector<32xf32>
    %101 = vector.shape_cast %100 : vector<32xf32> to vector<32x1xf32>
    %cst_38 = arith.constant 6.400000e+01 : f32
    %102 = vector.broadcast %cst_38 : f32 to vector<32x1xf32>
    %103 = arith.divf %101, %102 : vector<32x1xf32>
    %104 = vector.broadcast %96 : vector<32x1xf32> to vector<32x64xf32>
    %105 = arith.subf %88, %104 : vector<32x64xf32>
    %cst_39 = arith.constant 9.99999974E-6 : f32
    %106 = vector.broadcast %cst_39 : f32 to vector<32x1xf32>
    %107 = arith.addf %103, %106 : vector<32x1xf32>
    %108 = math.rsqrt %107 : vector<32x1xf32>
    %109 = vector.broadcast %108 : vector<32x1xf32> to vector<32x64xf32>
    %110 = arith.mulf %105, %109 : vector<32x64xf32>
    %111 = vector.broadcast %90 : vector<1x64xf32> to vector<32x64xf32>
    %112 = arith.mulf %110, %111 : vector<32x64xf32>
    %113 = vector.broadcast %92 : vector<1x64xf32> to vector<32x64xf32>
    %114 = arith.addf %112, %113 : vector<32x64xf32>
    %c0_40 = arith.constant 0 : index
    %c0_41 = arith.constant 0 : index
    %c0_42 = arith.constant 0 : index
    %115 = vector.load %arg11[%c0_40, %c0_41, %c0_42] : memref<1x64x128xbf16, #tpu.memory_space<vmem>>, vector<1x64x128xbf16>
    %116 = vector.shape_cast %115 : vector<1x64x128xbf16> to vector<64x128xbf16>
    %117 = arith.truncf %114 : vector<32x64xf32> to vector<32x64xbf16>
    %cst_43 = arith.constant dense<0.000000e+00> : vector<32x128xf32>
    %118 = tpu.matmul %117, %116, %cst_43 {dimension_numbers = #tpu.dot_dimension_numbers<[1], [0], [0], [1], [0, 0, 1, 1], [], []>} : vector<32x64xbf16>, vector<64x128xbf16>, vector<32x128xf32> -> vector<32x128xf32>
    %c0_44 = arith.constant 0 : index
    %c0_45 = arith.constant 0 : index
    %c0_46 = arith.constant 0 : index
    %119 = vector.load %arg12[%c0_44, %c0_45, %c0_46] : memref<1x1x128xf32, #tpu.memory_space<vmem>>, vector<1x1x128xf32>
    %120 = vector.shape_cast %119 : vector<1x1x128xf32> to vector<1x128xf32>
    %121 = vector.broadcast %120 : vector<1x128xf32> to vector<32x128xf32>
    %122 = arith.addf %118, %121 : vector<32x128xf32>
    %cst_47 = arith.constant 0.000000e+00 : f32
    %123 = vector.broadcast %cst_47 : f32 to vector<32x128xf32>
    %124 = arith.maximumf %122, %123 : vector<32x128xf32>
    %c0_48 = arith.constant 0 : index
    %c0_49 = arith.constant 0 : index
    %c0_50 = arith.constant 0 : index
    %125 = vector.load %arg13[%c0_48, %c0_49, %c0_50] : memref<1x128x64xbf16, #tpu.memory_space<vmem>>, vector<1x128x64xbf16>
    %126 = vector.shape_cast %125 : vector<1x128x64xbf16> to vector<128x64xbf16>
    %127 = arith.truncf %124 : vector<32x128xf32> to vector<32x128xbf16>
    %cst_51 = arith.constant dense<0.000000e+00> : vector<32x64xf32>
    %128 = tpu.matmul %127, %126, %cst_51 {dimension_numbers = #tpu.dot_dimension_numbers<[1], [0], [0], [1], [0, 0, 1, 1], [], []>} : vector<32x128xbf16>, vector<128x64xbf16>, vector<32x64xf32> -> vector<32x64xf32>
    %c0_52 = arith.constant 0 : index
    %c0_53 = arith.constant 0 : index
    %c0_54 = arith.constant 0 : index
    %129 = vector.load %arg14[%c0_52, %c0_53, %c0_54] : memref<1x1x64xf32, #tpu.memory_space<vmem>>, vector<1x1x64xf32>
    %130 = vector.shape_cast %129 : vector<1x1x64xf32> to vector<1x64xf32>
    %131 = vector.broadcast %130 : vector<1x64xf32> to vector<32x64xf32>
    %132 = arith.addf %128, %131 : vector<32x64xf32>
    %133 = arith.addf %114, %132 : vector<32x64xf32>
    %c0_55 = arith.constant 0 : index
    %c0_56 = arith.constant 0 : index
    %c0_57 = arith.constant 0 : index
    %134 = vector.load %arg15[%c0_55, %c0_56, %c0_57] : memref<1x1x64xf32, #tpu.memory_space<vmem>>, vector<1x1x64xf32>
    %135 = vector.shape_cast %134 : vector<1x1x64xf32> to vector<1x64xf32>
    %c0_58 = arith.constant 0 : index
    %c0_59 = arith.constant 0 : index
    %c0_60 = arith.constant 0 : index
    %136 = vector.load %arg16[%c0_58, %c0_59, %c0_60] : memref<1x1x64xf32, #tpu.memory_space<vmem>>, vector<1x1x64xf32>
    %137 = vector.shape_cast %136 : vector<1x1x64xf32> to vector<1x64xf32>
    %cst_61 = arith.constant dense<0.000000e+00> : vector<32xf32>
    %138 = vector.multi_reduction <add>, %133, %cst_61 [1] : vector<32x64xf32> to vector<32xf32>
    %139 = vector.shape_cast %138 : vector<32xf32> to vector<32x1xf32>
    %cst_62 = arith.constant 6.400000e+01 : f32
    %140 = vector.broadcast %cst_62 : f32 to vector<32x1xf32>
    %141 = arith.divf %139, %140 : vector<32x1xf32>
    %142 = vector.broadcast %141 : vector<32x1xf32> to vector<32x64xf32>
    %143 = arith.subf %133, %142 : vector<32x64xf32>
    %144 = arith.mulf %143, %143 : vector<32x64xf32>
    %cst_63 = arith.constant dense<0.000000e+00> : vector<32xf32>
    %145 = vector.multi_reduction <add>, %144, %cst_63 [1] : vector<32x64xf32> to vector<32xf32>
    %146 = vector.shape_cast %145 : vector<32xf32> to vector<32x1xf32>
    %cst_64 = arith.constant 6.400000e+01 : f32
    %147 = vector.broadcast %cst_64 : f32 to vector<32x1xf32>
    %148 = arith.divf %146, %147 : vector<32x1xf32>
    %149 = vector.broadcast %141 : vector<32x1xf32> to vector<32x64xf32>
    %150 = arith.subf %133, %149 : vector<32x64xf32>
    %cst_65 = arith.constant 9.99999974E-6 : f32
    %151 = vector.broadcast %cst_65 : f32 to vector<32x1xf32>
    %152 = arith.addf %148, %151 : vector<32x1xf32>
    %153 = math.rsqrt %152 : vector<32x1xf32>
    %154 = vector.broadcast %153 : vector<32x1xf32> to vector<32x64xf32>
    %155 = arith.mulf %150, %154 : vector<32x64xf32>
    %156 = vector.broadcast %135 : vector<1x64xf32> to vector<32x64xf32>
    %157 = arith.mulf %155, %156 : vector<32x64xf32>
    %158 = vector.broadcast %137 : vector<1x64xf32> to vector<32x64xf32>
    %159 = arith.addf %157, %158 : vector<32x64xf32>
    %160 = vector.shape_cast %159 : vector<32x64xf32> to vector<2x16x64xf32>
    %c0_66 = arith.constant 0 : index
    %c0_67 = arith.constant 0 : index
    %c0_68 = arith.constant 0 : index
    %161 = vector.load %arg18[%c0_66, %c0_67, %c0_68] : memref<2x16x64xf32, #tpu.memory_space<vmem>>, vector<2x16x64xf32>
    tpu.vector_store %arg18[%c0_66, %c0_67, %c0_68], %160 {strides = array<i32>} : memref<2x16x64xf32, #tpu.memory_space<vmem>>, vector<2x16x64xf32>,
    %c1_i32 = arith.constant 1 : i32
    %162 = arith.cmpi eq, %arg1, %c1_i32 : i32
    %163 = arith.extui %162 : i1 to i32
    %c0_i32_69 = arith.constant 0 : i32
    %164 = arith.cmpi ne, %163, %c0_i32_69 : i32
    scf.if %164 {
      %165 = arith.truncf %160 : vector<2x16x64xf32> to vector<2x16x64xbf16>
      %c0_70 = arith.constant 0 : index
      %c0_71 = arith.constant 0 : index
      %c0_72 = arith.constant 0 : index
      %166 = vector.load %arg17[%c0_70, %c0_71, %c0_72] : memref<2x16x64xbf16, #tpu.memory_space<vmem>>, vector<2x16x64xbf16>
      tpu.vector_store %arg17[%c0_70, %c0_71, %c0_72], %165 {strides = array<i32>} : memref<2x16x64xbf16, #tpu.memory_space<vmem>>, vector<2x16x64xbf16>,
    } else {
    }
    return
  }
  func.func @transform_0(%arg0: i32, %arg1: i32) -> (i32, i32, i32) {
    %c0_i32 = arith.constant 0 : i32
    %c0_i32_0 = arith.constant 0 : i32
    %c0_i32_1 = arith.constant 0 : i32
    return %arg0, %c0_i32, %c0_i32_0 : i32, i32, i32
  }
  func.func @transform_1(%arg0: i32, %arg1: i32) -> (i32, i32) {
    %c0_i32 = arith.constant 0 : i32
    %c0_i32_0 = arith.constant 0 : i32
    %c0_i32_1 = arith.constant 0 : i32
    return %c0_i32, %c0_i32_0 : i32, i32
  }
  func.func @transform_2(%arg0: i32, %arg1: i32) -> (i32, i32) {
    %c0_i32 = arith.constant 0 : i32
    %c0_i32_0 = arith.constant 0 : i32
    %c0_i32_1 = arith.constant 0 : i32
    return %c0_i32, %c0_i32_0 : i32, i32
  }
  func.func @transform_3(%arg0: i32, %arg1: i32) -> (i32, i32, i32) {
    %c0_i32 = arith.constant 0 : i32
    %c0_i32_0 = arith.constant 0 : i32
    %c0_i32_1 = arith.constant 0 : i32
    return %arg1, %c0_i32, %c0_i32_0 : i32, i32, i32
  }
  func.func @transform_4(%arg0: i32, %arg1: i32) -> (i32, i32, i32) {
    %c0_i32 = arith.constant 0 : i32
    %c0_i32_0 = arith.constant 0 : i32
    %c0_i32_1 = arith.constant 0 : i32
    return %arg1, %c0_i32, %c0_i32_0 : i32, i32, i32
  }
  func.func @transform_5(%arg0: i32, %arg1: i32) -> (i32, i32, i32) {
    %c0_i32 = arith.constant 0 : i32
    %c0_i32_0 = arith.constant 0 : i32
    %c0_i32_1 = arith.constant 0 : i32
    return %arg1, %c0_i32, %c0_i32_0 : i32, i32, i32
  }
  func.func @transform_6(%arg0: i32, %arg1: i32) -> (i32, i32, i32) {
    %c0_i32 = arith.constant 0 : i32
    %c0_i32_0 = arith.constant 0 : i32
    %c0_i32_1 = arith.constant 0 : i32
    return %arg1, %c0_i32, %c0_i32_0 : i32, i32, i32
  }
  func.func @transform_7(%arg0: i32, %arg1: i32) -> (i32, i32, i32) {
    %c0_i32 = arith.constant 0 : i32
    %c0_i32_0 = arith.constant 0 : i32
    %c0_i32_1 = arith.constant 0 : i32
    return %arg1, %c0_i32, %c0_i32_0 : i32, i32, i32
  }
  func.func @transform_8(%arg0: i32, %arg1: i32) -> (i32, i32, i32) {
    %c0_i32 = arith.constant 0 : i32
    %c0_i32_0 = arith.constant 0 : i32
    %c0_i32_1 = arith.constant 0 : i32
    return %arg1, %c0_i32, %c0_i32_0 : i32, i32, i32
  }
  func.func @transform_9(%arg0: i32, %arg1: i32) -> (i32, i32, i32) {
    %c0_i32 = arith.constant 0 : i32
    %c0_i32_0 = arith.constant 0 : i32
    %c0_i32_1 = arith.constant 0 : i32
    return %arg1, %c0_i32, %c0_i32_0 : i32, i32, i32
  }
  func.func @transform_10(%arg0: i32, %arg1: i32) -> (i32, i32, i32) {
    %c0_i32 = arith.constant 0 : i32
    %c0_i32_0 = arith.constant 0 : i32
    %c0_i32_1 = arith.constant 0 : i32
    return %arg1, %c0_i32, %c0_i32_0 : i32, i32, i32
  }
  func.func @transform_11(%arg0: i32, %arg1: i32) -> (i32, i32, i32) {
    %c0_i32 = arith.constant 0 : i32
    %c0_i32_0 = arith.constant 0 : i32
    %c0_i32_1 = arith.constant 0 : i32
    return %arg1, %c0_i32, %c0_i32_0 : i32, i32, i32
  }
  func.func @transform_12(%arg0: i32, %arg1: i32) -> (i32, i32, i32) {
    %c0_i32 = arith.constant 0 : i32
    %c0_i32_0 = arith.constant 0 : i32
    %c0_i32_1 = arith.constant 0 : i32
    return %arg1, %c0_i32, %c0_i32_0 : i32, i32, i32
  }
  func.func @transform_13(%arg0: i32, %arg1: i32) -> (i32, i32, i32) {
    %c0_i32 = arith.constant 0 : i32
    %c0_i32_0 = arith.constant 0 : i32
    %c0_i32_1 = arith.constant 0 : i32
    return %arg1, %c0_i32, %c0_i32_0 : i32, i32, i32
  }
  func.func @transform_14(%arg0: i32, %arg1: i32) -> (i32, i32, i32) {
    %c0_i32 = arith.constant 0 : i32
    %c0_i32_0 = arith.constant 0 : i32
    %c0_i32_1 = arith.constant 0 : i32
    return %arg1, %c0_i32, %c0_i32_0 : i32, i32, i32
  }
  func.func @transform_15(%arg0: i32, %arg1: i32) -> (i32, i32, i32) {
    %c0_i32 = arith.constant 0 : i32
    %c0_i32_0 = arith.constant 0 : i32
    %c0_i32_1 = arith.constant 0 : i32
    return %arg0, %c0_i32, %c0_i32_0 : i32, i32, i32
  }
}

</mosaic_0001>

<llo_original>
// kernel: tpu_custom_call.1
$region0: #{tpu_custom_call.1}
  #allocation0 [shape = 'u32[]', space=smem, size = 0x4, offset = 0x4, fixed_abs, tag = 'smem constant byte address 0x4 - core index']
  #allocation1 [shape = 'u32[144,128]{1,0:T(1,128)}', space=vmem, size = 0x12000, scoped, tag = 'internal scratch']
  #allocation2 [shape = 'f32[2,16,64]{2,1,0:T(8,128)}', space=vmem, size = 0x4000, scoped, tag = 'scratch operand']
  %s0 = inlined_call_operand.vmem [shape: f32[4,16,64], index: 0, kind: input, shape index: {}]
  %s1 = inlined_call_operand.hbm [shape: f32[16,64], index: 1, kind: input, shape index: {}]
  %s2 = inlined_call_operand.hbm [shape: f32[16,16], index: 2, kind: input, shape index: {}]
  %s3 = inlined_call_operand.vmem [shape: bf16[2,64,192], index: 3, kind: input, shape index: {}]
  %s4 = inlined_call_operand.vmem [shape: f32[2,1,192], index: 4, kind: input, shape index: {}]
  %s5 = inlined_call_operand.hbm [shape: bf16[2,64,64], index: 5, kind: input, shape index: {}]
  %s6 = inlined_call_operand.vmem [shape: f32[2,1,64], index: 6, kind: input, shape index: {}]
  %s7 = inlined_call_operand.vmem [shape: f32[2,1,64], index: 7, kind: input, shape index: {}]
  %s8 = inlined_call_operand.vmem [shape: f32[2,1,64], index: 8, kind: input, shape index: {}]
  %s9 = inlined_call_operand.hbm [shape: bf16[2,64,128], index: 9, kind: input, shape index: {}]
  %s10 = inlined_call_operand.vmem [shape: f32[2,1,128], index: 10, kind: input, shape index: {}]
  %s11 = inlined_call_operand.vmem [shape: bf16[2,128,64], index: 11, kind: input, shape index: {}]
  %s12 = inlined_call_operand.vmem [shape: f32[2,1,64], index: 12, kind: input, shape index: {}]
  %s13 = inlined_call_operand.vmem [shape: f32[2,1,64], index: 13, kind: input, shape index: {}]
  %s14 = inlined_call_operand.vmem [shape: f32[2,1,64], index: 14, kind: input, shape index: {}]
  %s15 = inlined_call_operand.hbm [shape: bf16[4,16,64], index: 15, kind: output, shape index: {}]
  %s16 = sld [smem:[#allocation0]]
  $region117: #{tpu_custom_call.1} parent=0
    _
  %s18 = ssub.s32 1, %s16
  %s19 = scalar_select 0, %s18, %s16
  $region1: #{tpu_custom_call.1} parent=0
    #allocation3 [shape = 'u8[8192]{0}', space=vmem, size = 0x2000, scoped, tag = 'input window, operand 1, single buffered']
    #allocation4 [shape = 's32[2]{0}', space=sflag, size = 0x8, scoped, tag = 'scoped memory for tpu_custom_call.1']
    #allocation5 [shape = 's32[2]{0}', space=sflag, size = 0x8, scoped, tag = 'scoped memory for tpu_custom_call.1']
    #allocation6 [shape = 'u8[8192]{0}', space=vmem, size = 0x2000, scoped, tag = 'input window, operand 2, single buffered']
    #allocation7 [shape = 's32[1]{0}', space=sflag, size = 0x4, scoped, tag = 'scoped memory for tpu_custom_call.1']
    #allocation8 [shape = 'u8[32768]{0}', space=vmem, size = 0x8000, scoped, tag = 'input window, operand 5']
    #allocation9 [shape = 'u8[32768]{0}', space=vmem, size = 0x8000, scoped, tag = 'input window, operand 9']
    #allocation10 [shape = 'u8[16384]{0}', space=vmem, size = 0x4000, scoped, tag = 'output window, operand 0']
    %20 = vsyncpa [#allocation4], 0
    %21 = vsyncpa [#allocation7], 0
    %22 = vsyncpa [#allocation5], 0
    %s23 = scalar_lea.sflag [#allocation5], 1
    %24 = vsyncpa %s23, 0
    loop: start=0, step=1, limit=6
    $region2: #{tpu_custom_call.1} parent=1 // loop_pre_header
      _
    $region3: #{tpu_custom_call.1} parent=1 // loop_header
      %s26 = sphi 0, %s30
      %p27 = scmp.ge.s32.totalorder %s26, 6
      %s33 = sphi 0, %s45
      %s34 = sphi 0, %s41
      %s35 = sphi 0, %s33
      %s36 = sphi 0, %s34
      %s37 = sphi 0, %s35
      %s38 = sphi 0, %s36
      %s48 = sphi 0, %s50
      %s51 = sphi 0, %s48
      %s52 = sphi 0, %s51
      %s68 = sphi 0, %s52
      %s72 = sphi 0, %s72
      %s74 = sphi 0, %s72
      %s75 = sphi 0, %s74
      %s89 = sphi 0, %s75
      %s93 = sphi 0, %s93
      %s95 = sphi 0, %s93
      %s96 = sphi 0, %s95
      %s110 = sphi 0, %s96
      %s116 = sphi 0, %s118
      %s119 = sphi 0, %s116
      %s120 = sphi 0, %s119
      %s136 = sphi 0, %s120
      %s142 = sphi 0, %s144
      %s145 = sphi 0, %s142
      %s146 = sphi 0, %s145
      %s162 = sphi 0, %s146
      %s168 = sphi 0, %s170
      %s171 = sphi 0, %s168
      %s172 = sphi 0, %s171
      %s188 = sphi 0, %s172
      %s194 = sphi 0, %s196
      %s197 = sphi 0, %s194
      %s198 = sphi 0, %s197
      %s214 = sphi 0, %s198
      %s220 = sphi 0, %s222
      %s223 = sphi 0, %s220
      %s224 = sphi 0, %s223
      %s240 = sphi 0, %s224
      %s246 = sphi 0, %s248
      %s249 = sphi 0, %s246
      %s250 = sphi 0, %s249
      %s266 = sphi 0, %s250
      %s272 = sphi 0, %s274
      %s275 = sphi 0, %s272
      %s276 = sphi 0, %s275
      %s292 = sphi 0, %s276
      %s298 = sphi 0, %s300
      %s301 = sphi 0, %s298
      %s302 = sphi 0, %s301
      %s318 = sphi 0, %s302
      %s324 = sphi 0, %s326
      %s327 = sphi 0, %s324
      %s328 = sphi 0, %s327
      %s344 = sphi 0, %s328
      %s350 = sphi 0, %s352
      %s353 = sphi 0, %s350
      %s354 = sphi 0, %s353
      %s370 = sphi 0, %s354
      %s376 = sphi 0, %s378
      %s379 = sphi 0, %s376
      %s380 = sphi 0, %s379
      %s396 = sphi 0, %s380
      %s402 = sphi 0, %s404
      %s405 = sphi 0, %s402
      %s406 = sphi 0, %s405
      %s422 = sphi 0, %s406
      %s428 = sphi 0, %s430
      %s431 = sphi 0, %s428
      %s432 = sphi 0, %s431
      %s448 = sphi 0, %s432
    $region4: #{tpu_custom_call.1} parent=1 // loop_header_branch
      %29 = sbr.rel (%p27) target = $region8
    $region5: #{tpu_custom_call.1} parent=1 // loop_body
      %s31 = ssub.s32 %s26, 1
      %s32 = ssub.s32 %s26, 2
      %s39 = sadd.s32 1, %s34
      %p40 = scmp.ge.s32.totalorder %s39, 2
      %s41 = scalar_select %p40, 0, %s39
      %s42 = sadd.s32 1, %s33
      %s43 = scalar_select %p40, %s42, %s33
      %p44 = scmp.ge.s32.totalorder %s43, 2
      %s45 = scalar_select %p44, 0, %s43
      %s46 = ssub.s32 %s33, %s45
      %p47 = scmp.eq.s32.totalorder %s46, 0
      %s49 = sadd.s32 %s48, 1
      %s50 = scalar_select %p47, %s48, %s49
      %p53 = pneg %p47
      %p54 = scmp.eq.s32.totalorder %s26, 3
      %p55 = por %p53, %p54
      %p56 = scmp.ne.s32.totalorder %s48, %s51
      %p57 = scmp.eq.s32.totalorder %s26, 0
      %p58 = por %p56, %p57
      %p59 = scmp.ne.s32.totalorder %s48, %s51
      %p60 = scmp.eq.s32.totalorder %s31, 3
      %p61 = por %p59, %p60
      %p62 = scmp.ne.s32.totalorder %s51, %s52
      %p63 = scmp.eq.s32.totalorder %s31, 0
      %p64 = por %p62, %p63
      %p65 = scmp.ne.s32.totalorder %s51, %s52
      %p66 = scmp.eq.s32.totalorder %s32, 3
      %p67 = por %p65, %p66
      %p69 = scmp.ne.s32.totalorder %s52, %s68
      %p70 = scmp.eq.s32.totalorder %s32, 0
      %p71 = por %p69, %p70
      %s73 = sadd.s32 %s72, 1
      %p76 = scmp.eq.s32.totalorder %s26, 3
      %p77 = scmp.ne.s32.totalorder %s72, %s74
      %p78 = scmp.eq.s32.totalorder %s26, 0
      %p79 = por %p77, %p78
      %p80 = scmp.ne.s32.totalorder %s72, %s74
      %p81 = scmp.eq.s32.totalorder %s31, 3
      %p82 = por %p80, %p81
      %p83 = scmp.ne.s32.totalorder %s74, %s75
      %p84 = scmp.eq.s32.totalorder %s31, 0
      %p85 = por %p83, %p84
      %p86 = scmp.ne.s32.totalorder %s74, %s75
      %p87 = scmp.eq.s32.totalorder %s32, 3
      %p88 = por %p86, %p87
      %p90 = scmp.ne.s32.totalorder %s75, %s89
      %p91 = scmp.eq.s32.totalorder %s32, 0
      %p92 = por %p90, %p91
      %s94 = sadd.s32 %s93, 1
      %p97 = scmp.eq.s32.totalorder %s26, 3
      %p98 = scmp.ne.s32.totalorder %s93, %s95
      %p99 = scmp.eq.s32.totalorder %s26, 0
      %p100 = por %p98, %p99
      %p101 = scmp.ne.s32.totalorder %s93, %s95
      %p102 = scmp.eq.s32.totalorder %s31, 3
      %p103 = por %p101, %p102
      %p104 = scmp.ne.s32.totalorder %s95, %s96
      %p105 = scmp.eq.s32.totalorder %s31, 0
      %p106 = por %p104, %p105
      %p107 = scmp.ne.s32.totalorder %s95, %s96
      %p108 = scmp.eq.s32.totalorder %s32, 3
      %p109 = por %p107, %p108
      %p111 = scmp.ne.s32.totalorder %s96, %s110
      %p112 = scmp.eq.s32.totalorder %s32, 0
      %p113 = por %p111, %p112
      %s114 = ssub.s32 %s34, %s41
      %p115 = scmp.eq.s32.totalorder %s114, 0
      %s117 = sadd.s32 %s116, 1
      %s118 = scalar_select %p115, %s116, %s117
      %p121 = pneg %p115
      %p122 = scmp.eq.s32.totalorder %s26, 3
      %p123 = por %p121, %p122
      %p124 = scmp.ne.s32.totalorder %s116, %s119
      %p125 = scmp.eq.s32.totalorder %s26, 0
      %p126 = por %p124, %p125
      %p127 = scmp.ne.s32.totalorder %s116, %s119
      %p128 = scmp.eq.s32.totalorder %s31, 3
      %p129 = por %p127, %p128
      %p130 = scmp.ne.s32.totalorder %s119, %s120
      %p131 = scmp.eq.s32.totalorder %s31, 0
      %p132 = por %p130, %p131
      %p133 = scmp.ne.s32.totalorder %s119, %s120
      %p134 = scmp.eq.s32.totalorder %s32, 3
      %p135 = por %p133, %p134
      %p137 = scmp.ne.s32.totalorder %s120, %s136
      %p138 = scmp.eq.s32.totalorder %s32, 0
      %p139 = por %p137, %p138
      %s140 = ssub.s32 %s34, %s41
      %p141 = scmp.eq.s32.totalorder %s140, 0
      %s143 = sadd.s32 %s142, 1
      %s144 = scalar_select %p141, %s142, %s143
      %p147 = pneg %p141
      %p148 = scmp.eq.s32.totalorder %s26, 3
      %p149 = por %p147, %p148
      %p150 = scmp.ne.s32.totalorder %s142, %s145
      %p151 = scmp.eq.s32.totalorder %s26, 0
      %p152 = por %p150, %p151
      %p153 = scmp.ne.s32.totalorder %s142, %s145
      %p154 = scmp.eq.s32.totalorder %s31, 3
      %p155 = por %p153, %p154
      %p156 = scmp.ne.s32.totalorder %s145, %s146
      %p157 = scmp.eq.s32.totalorder %s31, 0
      %p158 = por %p156, %p157
      %p159 = scmp.ne.s32.totalorder %s145, %s146
      %p160 = scmp.eq.s32.totalorder %s32, 3
      %p161 = por %p159, %p160
      %p163 = scmp.ne.s32.totalorder %s146, %s162
      %p164 = scmp.eq.s32.totalorder %s32, 0
      %p165 = por %p163, %p164
      %s166 = ssub.s32 %s34, %s41
      %p167 = scmp.eq.s32.totalorder %s166, 0
      %s169 = sadd.s32 %s168, 1
      %s170 = scalar_select %p167, %s168, %s169
      %p173 = pneg %p167
      %p174 = scmp.eq.s32.totalorder %s26, 3
      %p175 = por %p173, %p174
      %p176 = scmp.ne.s32.totalorder %s168, %s171
      %p177 = scmp.eq.s32.totalorder %s26, 0
      %p178 = por %p176, %p177
      %p179 = scmp.ne.s32.totalorder %s168, %s171
      %p180 = scmp.eq.s32.totalorder %s31, 3
      %p181 = por %p179, %p180
      %p182 = scmp.ne.s32.totalorder %s171, %s172
      %p183 = scmp.eq.s32.totalorder %s31, 0
      %p184 = por %p182, %p183
      %p185 = scmp.ne.s32.totalorder %s171, %s172
      %p186 = scmp.eq.s32.totalorder %s32, 3
      %p187 = por %p185, %p186
      %p189 = scmp.ne.s32.totalorder %s172, %s188
      %p190 = scmp.eq.s32.totalorder %s32, 0
      %p191 = por %p189, %p190
      %s192 = ssub.s32 %s34, %s41
      %p193 = scmp.eq.s32.totalorder %s192, 0
      %s195 = sadd.s32 %s194, 1
      %s196 = scalar_select %p193, %s194, %s195
      %p199 = pneg %p193
      %p200 = scmp.eq.s32.totalorder %s26, 3
      %p201 = por %p199, %p200
      %p202 = scmp.ne.s32.totalorder %s194, %s197
      %p203 = scmp.eq.s32.totalorder %s26, 0
      %p204 = por %p202, %p203
      %p205 = scmp.ne.s32.totalorder %s194, %s197
      %p206 = scmp.eq.s32.totalorder %s31, 3
      %p207 = por %p205, %p206
      %p208 = scmp.ne.s32.totalorder %s197, %s198
      %p209 = scmp.eq.s32.totalorder %s31, 0
      %p210 = por %p208, %p209
      %p211 = scmp.ne.s32.totalorder %s197, %s198
      %p212 = scmp.eq.s32.totalorder %s32, 3
      %p213 = por %p211, %p212
      %p215 = scmp.ne.s32.totalorder %s198, %s214
      %p216 = scmp.eq.s32.totalorder %s32, 0
      %p217 = por %p215, %p216
      %s218 = ssub.s32 %s34, %s41
      %p219 = scmp.eq.s32.totalorder %s218, 0
      %s221 = sadd.s32 %s220, 1
      %s222 = scalar_select %p219, %s220, %s221
      %p225 = pneg %p219
      %p226 = scmp.eq.s32.totalorder %s26, 3
      %p227 = por %p225, %p226
      %p228 = scmp.ne.s32.totalorder %s220, %s223
      %p229 = scmp.eq.s32.totalorder %s26, 0
      %p230 = por %p228, %p229
      %p231 = scmp.ne.s32.totalorder %s220, %s223
      %p232 = scmp.eq.s32.totalorder %s31, 3
      %p233 = por %p231, %p232
      %p234 = scmp.ne.s32.totalorder %s223, %s224
      %p235 = scmp.eq.s32.totalorder %s31, 0
      %p236 = por %p234, %p235
      %p237 = scmp.ne.s32.totalorder %s223, %s224
      %p238 = scmp.eq.s32.totalorder %s32, 3
      %p239 = por %p237, %p238
      %p241 = scmp.ne.s32.totalorder %s224, %s240
      %p242 = scmp.eq.s32.totalorder %s32, 0
      %p243 = por %p241, %p242
      %s244 = ssub.s32 %s34, %s41
      %p245 = scmp.eq.s32.totalorder %s244, 0
      %s247 = sadd.s32 %s246, 1
      %s248 = scalar_select %p245, %s246, %s247
      %p251 = pneg %p245
      %p252 = scmp.eq.s32.totalorder %s26, 3
      %p253 = por %p251, %p252
      %p254 = scmp.ne.s32.totalorder %s246, %s249
      %p255 = scmp.eq.s32.totalorder %s26, 0
      %p256 = por %p254, %p255
      %p257 = scmp.ne.s32.totalorder %s246, %s249
      %p258 = scmp.eq.s32.totalorder %s31, 3
      %p259 = por %p257, %p258
      %p260 = scmp.ne.s32.totalorder %s249, %s250
      %p261 = scmp.eq.s32.totalorder %s31, 0
      %p262 = por %p260, %p261
      %p263 = scmp.ne.s32.totalorder %s249, %s250
      %p264 = scmp.eq.s32.totalorder %s32, 3
      %p265 = por %p263, %p264
      %p267 = scmp.ne.s32.totalorder %s250, %s266
      %p268 = scmp.eq.s32.totalorder %s32, 0
      %p269 = por %p267, %p268
      %s270 = ssub.s32 %s34, %s41
      %p271 = scmp.eq.s32.totalorder %s270, 0
      %s273 = sadd.s32 %s272, 1
      %s274 = scalar_select %p271, %s272, %s273
      %p277 = pneg %p271
      %p278 = scmp.eq.s32.totalorder %s26, 3
      %p279 = por %p277, %p278
      %p280 = scmp.ne.s32.totalorder %s272, %s275
      %p281 = scmp.eq.s32.totalorder %s26, 0
      %p282 = por %p280, %p281
      %p283 = scmp.ne.s32.totalorder %s272, %s275
      %p284 = scmp.eq.s32.totalorder %s31, 3
      %p285 = por %p283, %p284
      %p286 = scmp.ne.s32.totalorder %s275, %s276
      %p287 = scmp.eq.s32.totalorder %s31, 0
      %p288 = por %p286, %p287
      %p289 = scmp.ne.s32.totalorder %s275, %s276
      %p290 = scmp.eq.s32.totalorder %s32, 3
      %p291 = por %p289, %p290
      %p293 = scmp.ne.s32.totalorder %s276, %s292
      %p294 = scmp.eq.s32.totalorder %s32, 0
      %p295 = por %p293, %p294
      %s296 = ssub.s32 %s34, %s41
      %p297 = scmp.eq.s32.totalorder %s296, 0
      %s299 = sadd.s32 %s298, 1
      %s300 = scalar_select %p297, %s298, %s299
      %p303 = pneg %p297
      %p304 = scmp.eq.s32.totalorder %s26, 3
      %p305 = por %p303, %p304
      %p306 = scmp.ne.s32.totalorder %s298, %s301
      %p307 = scmp.eq.s32.totalorder %s26, 0
      %p308 = por %p306, %p307
      %p309 = scmp.ne.s32.totalorder %s298, %s301
      %p310 = scmp.eq.s32.totalorder %s31, 3
      %p311 = por %p309, %p310
      %p312 = scmp.ne.s32.totalorder %s301, %s302
      %p313 = scmp.eq.s32.totalorder %s31, 0
      %p314 = por %p312, %p313
      %p315 = scmp.ne.s32.totalorder %s301, %s302
      %p316 = scmp.eq.s32.totalorder %s32, 3
      %p317 = por %p315, %p316
      %p319 = scmp.ne.s32.totalorder %s302, %s318
      %p320 = scmp.eq.s32.totalorder %s32, 0
      %p321 = por %p319, %p320
      %s322 = ssub.s32 %s34, %s41
      %p323 = scmp.eq.s32.totalorder %s322, 0
      %s325 = sadd.s32 %s324, 1
      %s326 = scalar_select %p323, %s324, %s325
      %p329 = pneg %p323
      %p330 = scmp.eq.s32.totalorder %s26, 3
      %p331 = por %p329, %p330
      %p332 = scmp.ne.s32.totalorder %s324, %s327
      %p333 = scmp.eq.s32.totalorder %s26, 0
      %p334 = por %p332, %p333
      %p335 = scmp.ne.s32.totalorder %s324, %s327
      %p336 = scmp.eq.s32.totalorder %s31, 3
      %p337 = por %p335, %p336
      %p338 = scmp.ne.s32.totalorder %s327, %s328
      %p339 = scmp.eq.s32.totalorder %s31, 0
      %p340 = por %p338, %p339
      %p341 = scmp.ne.s32.totalorder %s327, %s328
      %p342 = scmp.eq.s32.totalorder %s32, 3
      %p343 = por %p341, %p342
      %p345 = scmp.ne.s32.totalorder %s328, %s344
      %p346 = scmp.eq.s32.totalorder %s32, 0
      %p347 = por %p345, %p346
      %s348 = ssub.s32 %s34, %s41
      %p349 = scmp.eq.s32.totalorder %s348, 0
      %s351 = sadd.s32 %s350, 1
      %s352 = scalar_select %p349, %s350, %s351
      %p355 = pneg %p349
      %p356 = scmp.eq.s32.totalorder %s26, 3
      %p357 = por %p355, %p356
      %p358 = scmp.ne.s32.totalorder %s350, %s353
      %p359 = scmp.eq.s32.totalorder %s26, 0
      %p360 = por %p358, %p359
      %p361 = scmp.ne.s32.totalorder %s350, %s353
      %p362 = scmp.eq.s32.totalorder %s31, 3
      %p363 = por %p361, %p362
      %p364 = scmp.ne.s32.totalorder %s353, %s354
      %p365 = scmp.eq.s32.totalorder %s31, 0
      %p366 = por %p364, %p365
      %p367 = scmp.ne.s32.totalorder %s353, %s354
      %p368 = scmp.eq.s32.totalorder %s32, 3
      %p369 = por %p367, %p368
      %p371 = scmp.ne.s32.totalorder %s354, %s370
      %p372 = scmp.eq.s32.totalorder %s32, 0
      %p373 = por %p371, %p372
      %s374 = ssub.s32 %s34, %s41
      %p375 = scmp.eq.s32.totalorder %s374, 0
      %s377 = sadd.s32 %s376, 1
      %s378 = scalar_select %p375, %s376, %s377
      %p381 = pneg %p375
      %p382 = scmp.eq.s32.totalorder %s26, 3
      %p383 = por %p381, %p382
      %p384 = scmp.ne.s32.totalorder %s376, %s379
      %p385 = scmp.eq.s32.totalorder %s26, 0
      %p386 = por %p384, %p385
      %p387 = scmp.ne.s32.totalorder %s376, %s379
      %p388 = scmp.eq.s32.totalorder %s31, 3
      %p389 = por %p387, %p388
      %p390 = scmp.ne.s32.totalorder %s379, %s380
      %p391 = scmp.eq.s32.totalorder %s31, 0
      %p392 = por %p390, %p391
      %p393 = scmp.ne.s32.totalorder %s379, %s380
      %p394 = scmp.eq.s32.totalorder %s32, 3
      %p395 = por %p393, %p394
      %p397 = scmp.ne.s32.totalorder %s380, %s396
      %p398 = scmp.eq.s32.totalorder %s32, 0
      %p399 = por %p397, %p398
      %s400 = ssub.s32 %s34, %s41
      %p401 = scmp.eq.s32.totalorder %s400, 0
      %s403 = sadd.s32 %s402, 1
      %s404 = scalar_select %p401, %s402, %s403
      %p407 = pneg %p401
      %p408 = scmp.eq.s32.totalorder %s26, 3
      %p409 = por %p407, %p408
      %p410 = scmp.ne.s32.totalorder %s402, %s405
      %p411 = scmp.eq.s32.totalorder %s26, 0
      %p412 = por %p410, %p411
      %p413 = scmp.ne.s32.totalorder %s402, %s405
      %p414 = scmp.eq.s32.totalorder %s31, 3
      %p415 = por %p413, %p414
      %p416 = scmp.ne.s32.totalorder %s405, %s406
      %p417 = scmp.eq.s32.totalorder %s31, 0
      %p418 = por %p416, %p417
      %p419 = scmp.ne.s32.totalorder %s405, %s406
      %p420 = scmp.eq.s32.totalorder %s32, 3
      %p421 = por %p419, %p420
      %p423 = scmp.ne.s32.totalorder %s406, %s422
      %p424 = scmp.eq.s32.totalorder %s32, 0
      %p425 = por %p423, %p424
      %s426 = ssub.s32 %s33, %s45
      %p427 = scmp.eq.s32.totalorder %s426, 0
      %s429 = sadd.s32 %s428, 1
      %s430 = scalar_select %p427, %s428, %s429
      %p433 = pneg %p427
      %p434 = scmp.eq.s32.totalorder %s26, 3
      %p435 = por %p433, %p434
      %p436 = scmp.ne.s32.totalorder %s428, %s431
      %p437 = scmp.eq.s32.totalorder %s26, 0
      %p438 = por %p436, %p437
      %p439 = scmp.ne.s32.totalorder %s428, %s431
      %p440 = scmp.eq.s32.totalorder %s31, 3
      %p441 = por %p439, %p440
      %p442 = scmp.ne.s32.totalorder %s431, %s432
      %p443 = scmp.eq.s32.totalorder %s31, 0
      %p444 = por %p442, %p443
      %p445 = scmp.ne.s32.totalorder %s431, %s432
      %p446 = scmp.eq.s32.totalorder %s32, 3
      %p447 = por %p445, %p446
      %p449 = scmp.ne.s32.totalorder %s432, %s448
      %p450 = scmp.eq.s32.totalorder %s32, 0
      %p451 = por %p449, %p450
      %p452 = scmp.le.s32.totalorder 1, %s26
      %p453 = scmp.lt.s32.totalorder %s26, 5
      %p454 = pnand %p452, %p453
      %p455 = pneg %p454
      // Predicated region
      $region9: #{tpu_custom_call.1} parent=5 // pred_check
        _
      $region10: #{tpu_custom_call.1} parent=5 // pred_check_branch
        %457 = sbr.rel (%p454) target = $region12
      $region11: #{tpu_custom_call.1} parent=5 // pred_region
        %s458 = ssub.s32 %s26, 1
        // Predicated region
        $region13: #{tpu_custom_call.1} parent=11 // pred_check
          %p459 = pneg %p85
        $region14: #{tpu_custom_call.1} parent=11 // pred_check_branch
          %461 = sbr.rel (%p459) target = $region16
        $region15: #{tpu_custom_call.1} parent=11 // pred_region
          %s463 = ssub.s32 256, 256
          %464 = vsyncadd [#allocation4], %s463
          %s465 = sshll.u32 [#allocation3], 4
          %s466 = int_to_ptr.vmem [resolvable:$true] %s465
          %471 = dma.hbm_to_vmem [thread:$0]  %s1, 256, %s466, [#allocation4], 128, 128, 8
        $region16: #{tpu_custom_call.1} parent=11 // pred_fallthru
          _
        // Predicated region
        $region17: #{tpu_custom_call.1} parent=11 // pred_check
          %p472 = pneg %p106
        $region18: #{tpu_custom_call.1} parent=11 // pred_check_branch
          %474 = sbr.rel (%p472) target = $region20
        $region19: #{tpu_custom_call.1} parent=11 // pred_region
          %s476 = ssub.s32 256, 256
          %477 = vsyncadd [#allocation7], %s476
          %s478 = sshll.u32 [#allocation6], 4
          %s479 = int_to_ptr.vmem [resolvable:$true] %s478
          %484 = dma.hbm_to_vmem [thread:$0]  %s2, 256, %s479, [#allocation7], 128, 128, 8
        $region20: #{tpu_custom_call.1} parent=11 // pred_fallthru
          _
      $region12: #{tpu_custom_call.1} parent=5 // pred_fallthru
        _
      %p485 = scmp.lt.s32.totalorder %s26, 4
      // Predicated region
      $region21: #{tpu_custom_call.1} parent=5 // pred_check
        %p486 = pneg %p485
      $region22: #{tpu_custom_call.1} parent=5 // pred_check_branch
        %488 = sbr.rel (%p486) target = $region24
      $region23: #{tpu_custom_call.1} parent=5 // pred_region
        // Predicated region
        $region25: #{tpu_custom_call.1} parent=23 // pred_check
          %p489 = pneg %p58
        $region26: #{tpu_custom_call.1} parent=23 // pred_check_branch
          %491 = sbr.rel (%p489) target = $region28
        $region27: #{tpu_custom_call.1} parent=23 // pred_region
          %s492 = smul.u32 2, %s33
          %p493 = scmp.lt.s32.totalorder %s492, 3
          %s494 = scalar_select %p493, %s492, 3
          %s495 = smul.addr %s494, 2
          %s496 = smul.addr %s495, 8
          %s497 = scalar_lea.vmem %s0, %s496
          %s498 = smul.u32 2, %s33
        $region28: #{tpu_custom_call.1} parent=23 // pred_fallthru
          _
        // Predicated region
        $region29: #{tpu_custom_call.1} parent=23 // pred_check
          %p499 = pneg %p126
        $region30: #{tpu_custom_call.1} parent=23 // pred_check_branch
          %501 = sbr.rel (%p499) target = $region32
        $region31: #{tpu_custom_call.1} parent=23 // pred_region
          %p502 = scmp.lt.s32.totalorder %s34, 1
          %s503 = scalar_select %p502, %s34, 1
          %s504 = smul.addr %s503, 16
          %s505 = smul.addr %s504, 4
          %s506 = scalar_lea.vmem %s3, %s505
        $region32: #{tpu_custom_call.1} parent=23 // pred_fallthru
          _
        // Predicated region
        $region33: #{tpu_custom_call.1} parent=23 // pred_check
          %p507 = pneg %p152
        $region34: #{tpu_custom_call.1} parent=23 // pred_check_branch
          %509 = sbr.rel (%p507) target = $region36
        $region35: #{tpu_custom_call.1} parent=23 // pred_region
          %p510 = scmp.lt.s32.totalorder %s34, 1
          %s511 = scalar_select %p510, %s34, 1
          %s512 = smul.addr %s511, 2
          %s513 = scalar_lea.vmem %s4, %s512
        $region36: #{tpu_custom_call.1} parent=23 // pred_fallthru
          _
        // Predicated region
        $region37: #{tpu_custom_call.1} parent=23 // pred_check
          %p514 = pneg %p178
        $region38: #{tpu_custom_call.1} parent=23 // pred_check_branch
          %516 = sbr.rel (%p514) target = $region40
        $region39: #{tpu_custom_call.1} parent=23 // pred_region
          %s517 = sand.u32 %s26, 1
          %s518 = scalar_lea.sflag [#allocation4], %s517
          %s519 = sand.u32 %s168, 1
          %s520 = smul.addr %s519, 32
          %s521 = scalar_lea.vmem [#allocation8], %s520
          %s523 = ssub.s32 512, 512
          %524 = vsyncadd %s518, %s523
          %s525 = smul.addr %s34, 8
          %s526 = smul.addr %s525, 64
          %s527 = scalar_lea.hbm %s5, %s526
          %s528 = sshll.u32 %s521, 4
          %s529 = int_to_ptr.vmem [resolvable:$true] %s528
          %534 = dma.hbm_to_vmem [thread:$0]  %s527, 512, %s529, %s518, 64, 64, 4
        $region40: #{tpu_custom_call.1} parent=23 // pred_fallthru
          _
        // Predicated region
        $region41: #{tpu_custom_call.1} parent=23 // pred_check
          %p535 = pneg %p204
        $region42: #{tpu_custom_call.1} parent=23 // pred_check_branch
          %537 = sbr.rel (%p535) target = $region44
        $region43: #{tpu_custom_call.1} parent=23 // pred_region
          %p538 = scmp.lt.s32.totalorder %s34, 1
          %s539 = scalar_select %p538, %s34, 1
          %s540 = scalar_lea.vmem %s6, %s539
        $region44: #{tpu_custom_call.1} parent=23 // pred_fallthru
          _
        // Predicated region
        $region45: #{tpu_custom_call.1} parent=23 // pred_check
          %p541 = pneg %p230
        $region46: #{tpu_custom_call.1} parent=23 // pred_check_branch
          %543 = sbr.rel (%p541) target = $region48
        $region47: #{tpu_custom_call.1} parent=23 // pred_region
          %p544 = scmp.lt.s32.totalorder %s34, 1
          %s545 = scalar_select %p544, %s34, 1
          %s546 = scalar_lea.vmem %s7, %s545
        $region48: #{tpu_custom_call.1} parent=23 // pred_fallthru
          _
        // Predicated region
        $region49: #{tpu_custom_call.1} parent=23 // pred_check
          %p547 = pneg %p256
        $region50: #{tpu_custom_call.1} parent=23 // pred_check_branch
          %549 = sbr.rel (%p547) target = $region52
        $region51: #{tpu_custom_call.1} parent=23 // pred_region
          %p550 = scmp.lt.s32.totalorder %s34, 1
          %s551 = scalar_select %p550, %s34, 1
          %s552 = scalar_lea.vmem %s8, %s551
        $region52: #{tpu_custom_call.1} parent=23 // pred_fallthru
          _
        // Predicated region
        $region53: #{tpu_custom_call.1} parent=23 // pred_check
          %p553 = pneg %p282
        $region54: #{tpu_custom_call.1} parent=23 // pred_check_branch
          %555 = sbr.rel (%p553) target = $region56
        $region55: #{tpu_custom_call.1} parent=23 // pred_region
          %s556 = sand.u32 %s26, 1
          %s557 = scalar_lea.sflag [#allocation4], %s556
          %s558 = sand.u32 %s272, 1
          %s559 = smul.addr %s558, 32
          %s560 = scalar_lea.vmem [#allocation9], %s559
          %s562 = ssub.s32 512, 512
          %563 = vsyncadd %s557, %s562
          %s564 = smul.addr %s34, 8
          %s565 = smul.addr %s564, 64
          %s566 = scalar_lea.hbm %s9, %s565
          %s567 = sshll.u32 %s560, 4
          %s568 = int_to_ptr.vmem [resolvable:$true] %s567
          %573 = dma.hbm_to_vmem [thread:$0]  %s566, 512, %s568, %s557, 64, 64, 4
        $region56: #{tpu_custom_call.1} parent=23 // pred_fallthru
          _
        // Predicated region
        $region57: #{tpu_custom_call.1} parent=23 // pred_check
          %p574 = pneg %p308
        $region58: #{tpu_custom_call.1} parent=23 // pred_check_branch
          %576 = sbr.rel (%p574) target = $region60
        $region59: #{tpu_custom_call.1} parent=23 // pred_region
          %p577 = scmp.lt.s32.totalorder %s34, 1
          %s578 = scalar_select %p577, %s34, 1
          %s579 = scalar_lea.vmem %s10, %s578
        $region60: #{tpu_custom_call.1} parent=23 // pred_fallthru
          _
        // Predicated region
        $region61: #{tpu_custom_call.1} parent=23 // pred_check
          %p580 = pneg %p334
        $region62: #{tpu_custom_call.1} parent=23 // pred_check_branch
          %582 = sbr.rel (%p580) target = $region64
        $region63: #{tpu_custom_call.1} parent=23 // pred_region
          %p583 = scmp.lt.s32.totalorder %s34, 1
          %s584 = scalar_select %p583, %s34, 1
          %s585 = smul.addr %s584, 16
          %s586 = smul.addr %s585, 4
          %s587 = scalar_lea.vmem %s11, %s586
        $region64: #{tpu_custom_call.1} parent=23 // pred_fallthru
          _
        // Predicated region
        $region65: #{tpu_custom_call.1} parent=23 // pred_check
          %p588 = pneg %p360
        $region66: #{tpu_custom_call.1} parent=23 // pred_check_branch
          %590 = sbr.rel (%p588) target = $region68
        $region67: #{tpu_custom_call.1} parent=23 // pred_region
          %p591 = scmp.lt.s32.totalorder %s34, 1
          %s592 = scalar_select %p591, %s34, 1
          %s593 = scalar_lea.vmem %s12, %s592
        $region68: #{tpu_custom_call.1} parent=23 // pred_fallthru
          _
        // Predicated region
        $region69: #{tpu_custom_call.1} parent=23 // pred_check
          %p594 = pneg %p386
        $region70: #{tpu_custom_call.1} parent=23 // pred_check_branch
          %596 = sbr.rel (%p594) target = $region72
        $region71: #{tpu_custom_call.1} parent=23 // pred_region
          %p597 = scmp.lt.s32.totalorder %s34, 1
          %s598 = scalar_select %p597, %s34, 1
          %s599 = scalar_lea.vmem %s13, %s598
        $region72: #{tpu_custom_call.1} parent=23 // pred_fallthru
          _
        // Predicated region
        $region73: #{tpu_custom_call.1} parent=23 // pred_check
          %p600 = pneg %p412
        $region74: #{tpu_custom_call.1} parent=23 // pred_check_branch
          %602 = sbr.rel (%p600) target = $region76
        $region75: #{tpu_custom_call.1} parent=23 // pred_region
          %p603 = scmp.lt.s32.totalorder %s34, 1
          %s604 = scalar_select %p603, %s34, 1
          %s605 = scalar_lea.vmem %s14, %s604
        $region76: #{tpu_custom_call.1} parent=23 // pred_fallthru
          _
      $region24: #{tpu_custom_call.1} parent=5 // pred_fallthru
        _
      %p606 = scmp.le.s32.totalorder 1, %s26
      %p607 = scmp.lt.s32.totalorder %s26, 5
      %p608 = pnand %p606, %p607
      %p609 = pneg %p608
      // Predicated region
      $region77: #{tpu_custom_call.1} parent=5 // pred_check
        _
      $region78: #{tpu_custom_call.1} parent=5 // pred_check_branch
        %611 = sbr.rel (%p608) target = $region80
      $region79: #{tpu_custom_call.1} parent=5 // pred_region
        %s612 = ssub.s32 %s26, 1
        // Predicated region
        $region81: #{tpu_custom_call.1} parent=79 // pred_check
          %p613 = pneg %p85
        $region82: #{tpu_custom_call.1} parent=79 // pred_check_branch
          %615 = sbr.rel (%p613) target = $region84
        $region83: #{tpu_custom_call.1} parent=79 // pred_region
          %616 = dma.done [#allocation4], 256
        $region84: #{tpu_custom_call.1} parent=79 // pred_fallthru
          _
        // Predicated region
        $region85: #{tpu_custom_call.1} parent=79 // pred_check
          %p617 = pneg %p106
        $region86: #{tpu_custom_call.1} parent=79 // pred_check_branch
          %619 = sbr.rel (%p617) target = $region88
        $region87: #{tpu_custom_call.1} parent=79 // pred_region
          %620 = dma.done [#allocation7], 256
        $region88: #{tpu_custom_call.1} parent=79 // pred_fallthru
          _
        %s621 = sand.u32 %s31, 1
        %s622 = scalar_lea.sflag [#allocation4], %s621
        %s623 = sand.u32 %s171, 1
        %s624 = smul.addr %s623, 32
        %s625 = scalar_lea.vmem [#allocation8], %s624
        // Predicated region
        $region89: #{tpu_custom_call.1} parent=79 // pred_check
          %p626 = pneg %p184
        $region90: #{tpu_custom_call.1} parent=79 // pred_check_branch
          %628 = sbr.rel (%p626) target = $region92
        $region91: #{tpu_custom_call.1} parent=79 // pred_region
          %629 = dma.done %s622, 512
        $region92: #{tpu_custom_call.1} parent=79 // pred_fallthru
          _
        %s630 = sand.u32 %s31, 1
        %s631 = scalar_lea.sflag [#allocation4], %s630
        %s632 = sand.u32 %s275, 1
        %s633 = smul.addr %s632, 32
        %s634 = scalar_lea.vmem [#allocation9], %s633
        // Predicated region
        $region93: #{tpu_custom_call.1} parent=79 // pred_check
          %p635 = pneg %p288
        $region94: #{tpu_custom_call.1} parent=79 // pred_check_branch
          %637 = sbr.rel (%p635) target = $region96
        $region95: #{tpu_custom_call.1} parent=79 // pred_region
          %638 = dma.done %s631, 512
        $region96: #{tpu_custom_call.1} parent=79 // pred_fallthru
          _
        %s639 = smul.u32 2, %s35
        %p640 = scmp.lt.s32.totalorder %s639, 3
        %s641 = scalar_select %p640, %s639, 3
        %s642 = smul.addr %s641, 2
        %s643 = smul.addr %s642, 8
        %s644 = scalar_lea.vmem %s0, %s643
        %p645 = pneg %p64
        %p646 = pneg %p61
        %p647 = pneg %p85
        %p648 = pneg %p82
        %p649 = pneg %p106
        %p650 = pneg %p103
        %p651 = scmp.lt.s32.totalorder %s36, 1
        %s652 = scalar_select %p651, %s36, 1
        %s653 = smul.addr %s652, 16
        %s654 = smul.addr %s653, 4
        %s655 = scalar_lea.vmem %s3, %s654
        %p656 = pneg %p132
        %p657 = pneg %p129
        %p658 = scmp.lt.s32.totalorder %s36, 1
        %s659 = scalar_select %p658, %s36, 1
        %s660 = smul.addr %s659, 2
        %s661 = scalar_lea.vmem %s4, %s660
        %p662 = pneg %p158
        %p663 = pneg %p155
        %s664 = sand.u32 %s31, 1
        %s665 = scalar_lea.sflag [#allocation4], %s664
        %s666 = sand.u32 %s171, 1
        %s667 = smul.addr %s666, 32
        %s668 = scalar_lea.vmem [#allocation8], %s667
        %p669 = pneg %p184
        %p670 = pneg %p181
        %p671 = scmp.lt.s32.totalorder %s36, 1
        %s672 = scalar_select %p671, %s36, 1
        %s673 = scalar_lea.vmem %s6, %s672
        %p674 = pneg %p210
        %p675 = pneg %p207
        %p676 = scmp.lt.s32.totalorder %s36, 1
        %s677 = scalar_select %p676, %s36, 1
        %s678 = scalar_lea.vmem %s7, %s677
        %p679 = pneg %p236
        %p680 = pneg %p233
        %p681 = scmp.lt.s32.totalorder %s36, 1
        %s682 = scalar_select %p681, %s36, 1
        %s683 = scalar_lea.vmem %s8, %s682
        %p684 = pneg %p262
        %p685 = pneg %p259
        %s686 = sand.u32 %s31, 1
        %s687 = scalar_lea.sflag [#allocation4], %s686
        %s688 = sand.u32 %s275, 1
        %s689 = smul.addr %s688, 32
        %s690 = scalar_lea.vmem [#allocation9], %s689
        %p691 = pneg %p288
        %p692 = pneg %p285
        %p693 = scmp.lt.s32.totalorder %s36, 1
        %s694 = scalar_select %p693, %s36, 1
        %s695 = scalar_lea.vmem %s10, %s694
        %p696 = pneg %p314
        %p697 = pneg %p311
        %p698 = scmp.lt.s32.totalorder %s36, 1
        %s699 = scalar_select %p698, %s36, 1
        %s700 = smul.addr %s699, 16
        %s701 = smul.addr %s700, 4
        %s702 = scalar_lea.vmem %s11, %s701
        %p703 = pneg %p340
        %p704 = pneg %p337
        %p705 = scmp.lt.s32.totalorder %s36, 1
        %s706 = scalar_select %p705, %s36, 1
        %s707 = scalar_lea.vmem %s12, %s706
        %p708 = pneg %p366
        %p709 = pneg %p363
        %p710 = scmp.lt.s32.totalorder %s36, 1
        %s711 = scalar_select %p710, %s36, 1
        %s712 = scalar_lea.vmem %s13, %s711
        %p713 = pneg %p392
        %p714 = pneg %p389
        %p715 = scmp.lt.s32.totalorder %s36, 1
        %s716 = scalar_select %p715, %s36, 1
        %s717 = scalar_lea.vmem %s14, %s716
        %p718 = pneg %p418
        %p719 = pneg %p415
        %p720 = pneg %p444
        %p721 = pneg %p441
        %s722 = sand.u32 %s431, 1
        %s723 = scalar_lea.sflag [#allocation5], %s722
        %s724 = sand.u32 %s431, 1
        %s725 = smul.addr %s724, 16
        %s726 = scalar_lea.vmem [#allocation10], %s725
        %s727 = smul.u32 2, %s35
        %p728 = scmp.lt.s32.totalorder %s727, 3
        %s729 = scalar_select %p728, %s727, 3
        %s730 = smul.addr %s729, 2
        %s731 = smul.addr %s730, 8
        %s732 = scalar_lea.vmem %s0, %s731
        %s733 = smul.u32 2, %s35
        %p734 = scmp.lt.s32.totalorder %s36, 1
        %s735 = scalar_select %p734, %s36, 1
        %s736 = smul.addr %s735, 16
        %s737 = smul.addr %s736, 4
        %s738 = scalar_lea.vmem %s3, %s737
        %p739 = scmp.lt.s32.totalorder %s36, 1
        %s740 = scalar_select %p739, %s36, 1
        %s741 = smul.addr %s740, 2
        %s742 = scalar_lea.vmem %s4, %s741
        %p743 = scmp.lt.s32.totalorder %s36, 1
        %s744 = scalar_select %p743, %s36, 1
        %s745 = scalar_lea.vmem %s6, %s744
        %p746 = scmp.lt.s32.totalorder %s36, 1
        %s747 = scalar_select %p746, %s36, 1
        %s748 = scalar_lea.vmem %s7, %s747
        %p749 = scmp.lt.s32.totalorder %s36, 1
        %s750 = scalar_select %p749, %s36, 1
        %s751 = scalar_lea.vmem %s8, %s750
        %p752 = scmp.lt.s32.totalorder %s36, 1
        %s753 = scalar_select %p752, %s36, 1
        %s754 = scalar_lea.vmem %s10, %s753
        %p755 = scmp.lt.s32.totalorder %s36, 1
        %s756 = scalar_select %p755, %s36, 1
        %s757 = smul.addr %s756, 16
        %s758 = smul.addr %s757, 4
        %s759 = scalar_lea.vmem %s11, %s758
        %p760 = scmp.lt.s32.totalorder %s36, 1
        %s761 = scalar_select %p760, %s36, 1
        %s762 = scalar_lea.vmem %s12, %s761
        %p763 = scmp.lt.s32.totalorder %s36, 1
        %s764 = scalar_select %p763, %s36, 1
        %s765 = scalar_lea.vmem %s13, %s764
        %p766 = scmp.lt.s32.totalorder %s36, 1
        %s767 = scalar_select %p766, %s36, 1
        %s768 = scalar_lea.vmem %s14, %s767
        %s769 = smul.u32 2, %s35
        %p771 = scmp.eq.s32.totalorder %s36, 0
        // Predicated region
        $region97: #{tpu_custom_call.1} parent=79 // pred_check
          %p772 = pneg %p771
        $region98: #{tpu_custom_call.1} parent=79 // pred_check_branch
          %774 = sbr.rel (%p772) target = $region100
        $region99: #{tpu_custom_call.1} parent=79 // pred_region
          %v775 = vld [vmem:[%s732] sm:$0xff]
          %v776 = vld [vmem:[%s732 + $0x8] sm:$0xff]
          %v777 = vld [vmem:[%s732 + $0x10] sm:$0xff]
          %v778 = vld [vmem:[%s732 + $0x18] sm:$0xff]
          %v779 = vmul.f32 %v775, 8.0
          %v780 = vmul.f32 %v776, 8.0
          %v781 = vmul.f32 %v777, 8.0
          %v782 = vmul.f32 %v778, 8.0
          %v783 = vld [vmem:[#allocation3] sm:$0xff]
          %v784 = vld [vmem:[#allocation3 + $0x8] sm:$0xff]
          %v785 = vadd.f32 %v779, %v783
          %v786 = vadd.f32 %v780, %v784
          %v787 = vadd.f32 %v781, %v783
          %v788 = vadd.f32 %v782, %v784
          %vm789 = vcmask 523264
          %790 = vst.msk [vmem:[#allocation2] sm:$0xff] %vm789, %v785
          %791 = vst.msk [vmem:[#allocation2 + $0x8] sm:$0xff] %vm789, %v786
          %792 = vst.msk [vmem:[#allocation2 + $0x10] sm:$0xff] %vm789, %v787
          %793 = vst.msk [vmem:[#allocation2 + $0x18] sm:$0xff] %vm789, %v788
        $region100: #{tpu_custom_call.1} parent=79 // pred_fallthru
          _
        %v794 = vld [vmem:[#allocation2] sm:$0xff]
        %v795 = vld [vmem:[#allocation2 + $0x8] sm:$0xff]
        %v796 = vld [vmem:[#allocation2 + $0x10] sm:$0xff]
        %v797 = vld [vmem:[#allocation2 + $0x18] sm:$0xff]
        %v798 = vld [vmem:[#allocation6] sm:$0xff]
        %v799 = vld [vmem:[#allocation6 + $0x8] sm:$0xff]
        %v800 = vld [vmem:[%s738] sm:$0xff]
        %v801 = vld [vmem:[%s738 + $0x8] sm:$0xff]
        %v802 = vld [vmem:[%s738 + $0x10] sm:$0xff]
        %v803 = vld [vmem:[%s738 + $0x18] sm:$0xff]
        %v804 = vld [vmem:[%s738 + $0x20] sm:$0xff]
        %v805 = vld [vmem:[%s738 + $0x28] sm:$0xff]
        %v806 = vld [vmem:[%s738 + $0x30] sm:$0xff]
        %v807 = vld [vmem:[%s738 + $0x38] sm:$0xff]
        %v808 = vpack.c.bf16 %v795, %v794
        %v809 = vpack.c.bf16 %v797, %v796
        %v810 = vld [vmem:[%s742] sm:$0x3]
        %v812 = vlaneseq
        %v813 = vshrl.u32 %v812, 7
        %v814 = vsub.s32 0, %v813
        %v815 = vrot.slane %v810, %v814
        %v816 = vlaneseq
        %v817 = vshrl.u32 %v816, 7
        %v818 = vsub.s32 1, %v817
        %v819 = vrot.slane %v810, %v818
        %v830 = vunpack.c.l.b16 %v800
        %v831 = vunpack.c.h.b16 %v800
        %v832 = vunpack.c.l.b16 %v801
        %v833 = vunpack.c.h.b16 %v801
        %v834 = vunpack.c.l.b16 %v802
        %v835 = vunpack.c.h.b16 %v802
        %v836 = vunpack.c.l.b16 %v803
        %v837 = vunpack.c.h.b16 %v803
        %v838 = vunpack.c.l.b16 %v804
        %v839 = vunpack.c.h.b16 %v804
        %v840 = vunpack.c.l.b16 %v805
        %v841 = vunpack.c.h.b16 %v805
        %v842 = vunpack.c.l.b16 %v806
        %v843 = vunpack.c.h.b16 %v806
        %v844 = vunpack.c.l.b16 %v807
        %v845 = vunpack.c.h.b16 %v807
        %v846 = vpack.c.b16 %v832, %v830
        %v847 = vpack.c.b16 %v833, %v831
        %v848 = vpack.c.b16 %v836, %v834
        %v849 = vpack.c.b16 %v837, %v835
        %v850 = vpack.c.b16 %v840, %v838
        %v851 = vpack.c.b16 %v841, %v839
        %v852 = vpack.c.b16 %v844, %v842
        %v853 = vpack.c.b16 %v845, %v843
        %vm862 = vcmask 523264
        %v864 = vsel %vm862, %v808, 0
        %v867 = vsel %vm862, %v809, 0
        %869 = vmatprep.subr.bf16.mxu0 %v847
        %870 = vmatpush1.bf16.msra.mxu0 %v846
        %871 = vmatprep.subr.bf16.mxu0 %v849
        %872 = vmatpush1.bf16.msra.mxu0 %v848
        %873 = vmatprep.subr.bf16.mxu0 %v851
        %874 = vmatpush1.bf16.msra.mxu0 %v850
        %875 = vmatprep.subr.bf16.mxu0 %v853
        %876 = vmatpush1.bf16.msra.mxu0 %v852
        %877 = vmatprep.subr.bf16.mxu0 0
        %878 = vmatpush1.bf16.msra.mxu0 0
        %879 = vmatprep.subr.bf16.mxu0 0
        %880 = vmatpush1.bf16.msra.mxu0 0
        %881 = vmatprep.subr.bf16.mxu0 0
        %882 = vmatpush1.bf16.msra.mxu0 0
        %883 = vmatprep.subr.bf16.mxu0 0
        %884 = vmatpush1.bf16.msra.mxu0 0
        %885 = vmatprep.subr.bf16.mxu0 0
        %886 = vmatpush1.bf16.msra.mxu0 0
        %887 = vmatprep.subr.bf16.mxu0 0
        %888 = vmatpush1.bf16.msra.mxu0 0
        %889 = vmatprep.subr.bf16.mxu0 0
        %890 = vmatpush1.bf16.msra.mxu0 0
        %891 = vmatprep.subr.bf16.mxu0 0
        %892 = vmatpush1.bf16.msra.mxu0 0
        %893 = vmatprep.subr.bf16.mxu0 0
        %894 = vmatpush1.bf16.msra.mxu0 0
        %895 = vmatprep.subr.bf16.mxu0 0
        %896 = vmatpush1.bf16.msra.mxu0 0
        %897 = vmatprep.subr.bf16.mxu0 0
        %898 = vmatpush1.bf16.msra.mxu0 0
        %899 = vmatprep.subr.bf16.mxu0 0
        %900 = vmatpush1.bf16.msra.mxu0 0
        %901 = vmatprep.mubr.bf16.mxu0 0
        %902 = vmatmul.mubr.bf16.gmra.mrb[0].mxu0 %v864
        %v903 = vpop.f32.mrb[0].mxu0
        %v904 = vadd.f32 %v815, %v903
        %v905 = vpop.f32.mrb[0].mxu0
        %v906 = vadd.f32 %v819, %v905
        %v907 = vpop.f32.mrb[0].mxu0
        %v908 = vadd.f32 %v815, %v907
        %v909 = vpop.f32.mrb[0].mxu0
        %v910 = vadd.f32 %v819, %v909
        %911 = vmatprep.mubr.bf16.mxu0 0
        %912 = vmatmul.mubr.bf16.gmra.mrb[0].mxu0 %v867
        %v913 = vpop.f32.mrb[0].mxu0
        %v914 = vadd.f32 %v815, %v913
        %v915 = vpop.f32.mrb[0].mxu0
        %v916 = vadd.f32 %v819, %v915
        %v917 = vpop.f32.mrb[0].mxu0
        %v918 = vadd.f32 %v815, %v917
        %v919 = vpop.f32.mrb[0].mxu0
        %v920 = vadd.f32 %v819, %v919
        %921 = vdwg.mxu0
        %v922 = vpack.c.bf16 %v908, %v904
        %v923 = vpack.c.bf16 %v918, %v914
        %925 = vrot.lane.b32.xlu0 %v922, 64
        %v926 = vpop.permute.xlu0 %925
        %vm927 = vcmask 130048
        %v929 = vsel %vm927, %v922, 0
        %v932 = vsel %vm927, %v926, 0
        %934 = vmatprep.subr.bf16.mxu0 0
        %935 = vmatpush1.bf16.xpose.msra.mxu0 %v932
        %936 = vmatprep.subr.bf16.mxu0 0
        %937 = vmatpush1.bf16.xpose.msra.mxu0 0
        %938 = vmatprep.subr.bf16.mxu0 0
        %939 = vmatpush1.bf16.xpose.msra.mxu0 0
        %940 = vmatprep.subr.bf16.mxu0 0
        %941 = vmatpush1.bf16.xpose.msra.mxu0 0
        %942 = vmatprep.subr.bf16.mxu0 0
        %943 = vmatpush1.bf16.xpose.msra.mxu0 0
        %944 = vmatprep.subr.bf16.mxu0 0
        %945 = vmatpush1.bf16.xpose.msra.mxu0 0
        %946 = vmatprep.subr.bf16.mxu0 0
        %947 = vmatpush1.bf16.xpose.msra.mxu0 0
        %948 = vmatprep.subr.bf16.mxu0 0
        %949 = vmatpush1.bf16.xpose.msra.mxu0 0
        %950 = vmatprep.subr.bf16.mxu0 0
        %951 = vmatpush1.bf16.xpose.msra.mxu0 0
        %952 = vmatprep.subr.bf16.mxu0 0
        %953 = vmatpush1.bf16.xpose.msra.mxu0 0
        %954 = vmatprep.subr.bf16.mxu0 0
        %955 = vmatpush1.bf16.xpose.msra.mxu0 0
        %956 = vmatprep.subr.bf16.mxu0 0
        %957 = vmatpush1.bf16.xpose.msra.mxu0 0
        %958 = vmatprep.subr.bf16.mxu0 0
        %959 = vmatpush1.bf16.xpose.msra.mxu0 0
        %960 = vmatprep.subr.bf16.mxu0 0
        %961 = vmatpush1.bf16.xpose.msra.mxu0 0
        %962 = vmatprep.subr.bf16.mxu0 0
        %963 = vmatpush1.bf16.xpose.msra.mxu0 0
        %964 = vmatprep.subr.bf16.mxu0 0
        %965 = vmatpush1.bf16.xpose.msra.mxu0 0
        %966 = vmatprep.mubr.bf16.mxu0 0
        %967 = vmatmul.mubr.bf16.gmra.mrb[0].mxu0 %v929
        %v968 = vpop.f32.mrb[0].mxu0
        %v969 = vadd.f32 0.0, %v968
        %v970 = vpop.f32.mrb[0].mxu0
        %v971 = vpop.f32.mrb[0].mxu0
        %v972 = vadd.f32 0.0, %v971
        %v973 = vpop.f32.mrb[0].mxu0
        %974 = vdwg.mxu0
        %976 = vrot.lane.b32.xlu0 %v923, 64
        %v977 = vpop.permute.xlu0 %976
        %v979 = vsel %vm927, %v923, 0
        %v982 = vsel %vm927, %v977, 0
        %984 = vmatprep.subr.bf16.mxu0 0
        %985 = vmatpush1.bf16.xpose.msra.mxu0 %v982
        %986 = vmatprep.subr.bf16.mxu0 0
        %987 = vmatpush1.bf16.xpose.msra.mxu0 0
        %988 = vmatprep.subr.bf16.mxu0 0
        %989 = vmatpush1.bf16.xpose.msra.mxu0 0
        %990 = vmatprep.subr.bf16.mxu0 0
        %991 = vmatpush1.bf16.xpose.msra.mxu0 0
        %992 = vmatprep.subr.bf16.mxu0 0
        %993 = vmatpush1.bf16.xpose.msra.mxu0 0
        %994 = vmatprep.subr.bf16.mxu0 0
        %995 = vmatpush1.bf16.xpose.msra.mxu0 0
        %996 = vmatprep.subr.bf16.mxu0 0
        %997 = vmatpush1.bf16.xpose.msra.mxu0 0
        %998 = vmatprep.subr.bf16.mxu0 0
        %999 = vmatpush1.bf16.xpose.msra.mxu0 0
        %1000 = vmatprep.subr.bf16.mxu0 0
        %1001 = vmatpush1.bf16.xpose.msra.mxu0 0
        %1002 = vmatprep.subr.bf16.mxu0 0
        %1003 = vmatpush1.bf16.xpose.msra.mxu0 0
        %1004 = vmatprep.subr.bf16.mxu0 0
        %1005 = vmatpush1.bf16.xpose.msra.mxu0 0
        %1006 = vmatprep.subr.bf16.mxu0 0
        %1007 = vmatpush1.bf16.xpose.msra.mxu0 0
        %1008 = vmatprep.subr.bf16.mxu0 0
        %1009 = vmatpush1.bf16.xpose.msra.mxu0 0
        %1010 = vmatprep.subr.bf16.mxu0 0
        %1011 = vmatpush1.bf16.xpose.msra.mxu0 0
        %1012 = vmatprep.subr.bf16.mxu0 0
        %1013 = vmatpush1.bf16.xpose.msra.mxu0 0
        %1014 = vmatprep.subr.bf16.mxu0 0
        %1015 = vmatpush1.bf16.xpose.msra.mxu0 0
        %1016 = vmatprep.mubr.bf16.mxu0 0
        %1017 = vmatmul.mubr.bf16.gmra.mrb[0].mxu0 %v979
        %v1018 = vpop.f32.mrb[0].mxu0
        %v1019 = vadd.f32 0.0, %v1018
        %v1020 = vpop.f32.mrb[0].mxu0
        %v1021 = vpop.f32.mrb[0].mxu0
        %v1022 = vadd.f32 0.0, %v1021
        %v1023 = vpop.f32.mrb[0].mxu0
        %1024 = vdwg.mxu0
        %1025 = vrot.lane.b32.xlu0 %v922, 112
        %v1026 = vpop.permute.xlu0 %1025
        %1027 = vrot.lane.b32.xlu0 %v922, 48
        %v1028 = vpop.permute.xlu0 %1027
        %v1030 = vsel %vm927, %v1026, 0
        %v1033 = vsel %vm927, %v1028, 0
        %1035 = vmatprep.subr.bf16.mxu0 0
        %1036 = vmatpush1.bf16.xpose.msra.mxu0 %v1033
        %1037 = vmatprep.subr.bf16.mxu0 0
        %1038 = vmatpush1.bf16.xpose.msra.mxu0 0
        %1039 = vmatprep.subr.bf16.mxu0 0
        %1040 = vmatpush1.bf16.xpose.msra.mxu0 0
        %1041 = vmatprep.subr.bf16.mxu0 0
        %1042 = vmatpush1.bf16.xpose.msra.mxu0 0
        %1043 = vmatprep.subr.bf16.mxu0 0
        %1044 = vmatpush1.bf16.xpose.msra.mxu0 0
        %1045 = vmatprep.subr.bf16.mxu0 0
        %1046 = vmatpush1.bf16.xpose.msra.mxu0 0
        %1047 = vmatprep.subr.bf16.mxu0 0
        %1048 = vmatpush1.bf16.xpose.msra.mxu0 0
        %1049 = vmatprep.subr.bf16.mxu0 0
        %1050 = vmatpush1.bf16.xpose.msra.mxu0 0
        %1051 = vmatprep.subr.bf16.mxu0 0
        %1052 = vmatpush1.bf16.xpose.msra.mxu0 0
        %1053 = vmatprep.subr.bf16.mxu0 0
        %1054 = vmatpush1.bf16.xpose.msra.mxu0 0
        %1055 = vmatprep.subr.bf16.mxu0 0
        %1056 = vmatpush1.bf16.xpose.msra.mxu0 0
        %1057 = vmatprep.subr.bf16.mxu0 0
        %1058 = vmatpush1.bf16.xpose.msra.mxu0 0
        %1059 = vmatprep.subr.bf16.mxu0 0
        %1060 = vmatpush1.bf16.xpose.msra.mxu0 0
        %1061 = vmatprep.subr.bf16.mxu0 0
        %1062 = vmatpush1.bf16.xpose.msra.mxu0 0
        %1063 = vmatprep.subr.bf16.mxu0 0
        %1064 = vmatpush1.bf16.xpose.msra.mxu0 0
        %1065 = vmatprep.subr.bf16.mxu0 0
        %1066 = vmatpush1.bf16.xpose.msra.mxu0 0
        %1067 = vmatprep.mubr.bf16.mxu0 0
        %1068 = vmatmul.mubr.bf16.gmra.mrb[0].mxu0 %v1030
        %v1069 = vpop.f32.mrb[0].mxu0
        %v1070 = vadd.f32 0.0, %v1069
        %v1071 = vpop.f32.mrb[0].mxu0
        %v1072 = vpop.f32.mrb[0].mxu0
        %v1073 = vadd.f32 0.0, %v1072
        %v1074 = vpop.f32.mrb[0].mxu0
        %1075 = vdwg.mxu0
        %1076 = vrot.lane.b32.xlu0 %v923, 112
        %v1077 = vpop.permute.xlu0 %1076
        %1078 = vrot.lane.b32.xlu0 %v923, 48
        %v1079 = vpop.permute.xlu0 %1078
        %v1081 = vsel %vm927, %v1077, 0
        %v1084 = vsel %vm927, %v1079, 0
        %1086 = vmatprep.subr.bf16.mxu0 0
        %1087 = vmatpush1.bf16.xpose.msra.mxu0 %v1084
        %1088 = vmatprep.subr.bf16.mxu0 0
        %1089 = vmatpush1.bf16.xpose.msra.mxu0 0
        %1090 = vmatprep.subr.bf16.mxu0 0
        %1091 = vmatpush1.bf16.xpose.msra.mxu0 0
        %1092 = vmatprep.subr.bf16.mxu0 0
        %1093 = vmatpush1.bf16.xpose.msra.mxu0 0
        %1094 = vmatprep.subr.bf16.mxu0 0
        %1095 = vmatpush1.bf16.xpose.msra.mxu0 0
        %1096 = vmatprep.subr.bf16.mxu0 0
        %1097 = vmatpush1.bf16.xpose.msra.mxu0 0
        %1098 = vmatprep.subr.bf16.mxu0 0
        %1099 = vmatpush1.bf16.xpose.msra.mxu0 0
        %1100 = vmatprep.subr.bf16.mxu0 0
        %1101 = vmatpush1.bf16.xpose.msra.mxu0 0
        %1102 = vmatprep.subr.bf16.mxu0 0
        %1103 = vmatpush1.bf16.xpose.msra.mxu0 0
        %1104 = vmatprep.subr.bf16.mxu0 0
        %1105 = vmatpush1.bf16.xpose.msra.mxu0 0
        %1106 = vmatprep.subr.bf16.mxu0 0
        %1107 = vmatpush1.bf16.xpose.msra.mxu0 0
        %1108 = vmatprep.subr.bf16.mxu0 0
        %1109 = vmatpush1.bf16.xpose.msra.mxu0 0
        %1110 = vmatprep.subr.bf16.mxu0 0
        %1111 = vmatpush1.bf16.xpose.msra.mxu0 0
        %1112 = vmatprep.subr.bf16.mxu0 0
        %1113 = vmatpush1.bf16.xpose.msra.mxu0 0
        %1114 = vmatprep.subr.bf16.mxu0 0
        %1115 = vmatpush1.bf16.xpose.msra.mxu0 0
        %1116 = vmatprep.subr.bf16.mxu0 0
        %1117 = vmatpush1.bf16.xpose.msra.mxu0 0
        %1118 = vmatprep.mubr.bf16.mxu0 0
        %1119 = vmatmul.mubr.bf16.gmra.mrb[0].mxu0 %v1081
        %v1120 = vpop.f32.mrb[0].mxu0
        %v1121 = vadd.f32 0.0, %v1120
        %v1122 = vpop.f32.mrb[0].mxu0
        %v1123 = vpop.f32.mrb[0].mxu0
        %v1124 = vadd.f32 0.0, %v1123
        %v1125 = vpop.f32.mrb[0].mxu0
        %1126 = vdwg.mxu0
        %1127 = vrot.lane.b32.xlu0 %v922, 96
        %v1128 = vpop.permute.xlu0 %1127
        %1129 = vrot.lane.b32.xlu0 %v922, 32
        %v1130 = vpop.permute.xlu0 %1129
        %v1132 = vsel %vm927, %v1128, 0
        %v1135 = vsel %vm927, %v1130, 0
        %1137 = vmatprep.subr.bf16.mxu0 0
        %1138 = vmatpush1.bf16.xpose.msra.mxu0 %v1135
        %1139 = vmatprep.subr.bf16.mxu0 0
        %1140 = vmatpush1.bf16.xpose.msra.mxu0 0
        %1141 = vmatprep.subr.bf16.mxu0 0
        %1142 = vmatpush1.bf16.xpose.msra.mxu0 0
        %1143 = vmatprep.subr.bf16.mxu0 0
        %1144 = vmatpush1.bf16.xpose.msra.mxu0 0
        %1145 = vmatprep.subr.bf16.mxu0 0
        %1146 = vmatpush1.bf16.xpose.msra.mxu0 0
        %1147 = vmatprep.subr.bf16.mxu0 0
        %1148 = vmatpush1.bf16.xpose.msra.mxu0 0
        %1149 = vmatprep.subr.bf16.mxu0 0
        %1150 = vmatpush1.bf16.xpose.msra.mxu0 0
        %1151 = vmatprep.subr.bf16.mxu0 0
        %1152 = vmatpush1.bf16.xpose.msra.mxu0 0
        %1153 = vmatprep.subr.bf16.mxu0 0
        %1154 = vmatpush1.bf16.xpose.msra.mxu0 0
        %1155 = vmatprep.subr.bf16.mxu0 0
        %1156 = vmatpush1.bf16.xpose.msra.mxu0 0
        %1157 = vmatprep.subr.bf16.mxu0 0
        %1158 = vmatpush1.bf16.xpose.msra.mxu0 0
        %1159 = vmatprep.subr.bf16.mxu0 0
        %1160 = vmatpush1.bf16.xpose.msra.mxu0 0
        %1161 = vmatprep.subr.bf16.mxu0 0
        %1162 = vmatpush1.bf16.xpose.msra.mxu0 0
        %1163 = vmatprep.subr.bf16.mxu0 0
        %1164 = vmatpush1.bf16.xpose.msra.mxu0 0
        %1165 = vmatprep.subr.bf16.mxu0 0
        %1166 = vmatpush1.bf16.xpose.msra.mxu0 0
        %1167 = vmatprep.subr.bf16.mxu0 0
        %1168 = vmatpush1.bf16.xpose.msra.mxu0 0
        %1169 = vmatprep.mubr.bf16.mxu0 0
        %1170 = vmatmul.mubr.bf16.gmra.mrb[0].mxu0 %v1132
        %v1171 = vpop.f32.mrb[0].mxu0
        %v1172 = vadd.f32 0.0, %v1171
        %v1173 = vpop.f32.mrb[0].mxu0
        %v1174 = vpop.f32.mrb[0].mxu0
        %v1175 = vadd.f32 0.0, %v1174
        %v1176 = vpop.f32.mrb[0].mxu0
        %1177 = vdwg.mxu0
        %1178 = vrot.lane.b32.xlu0 %v923, 96
        %v1179 = vpop.permute.xlu0 %1178
        %1180 = vrot.lane.b32.xlu0 %v923, 32
        %v1181 = vpop.permute.xlu0 %1180
        %v1183 = vsel %vm927, %v1179, 0
        %v1186 = vsel %vm927, %v1181, 0
        %1188 = vmatprep.subr.bf16.mxu0 0
        %1189 = vmatpush1.bf16.xpose.msra.mxu0 %v1186
        %1190 = vmatprep.subr.bf16.mxu0 0
        %1191 = vmatpush1.bf16.xpose.msra.mxu0 0
        %1192 = vmatprep.subr.bf16.mxu0 0
        %1193 = vmatpush1.bf16.xpose.msra.mxu0 0
        %1194 = vmatprep.subr.bf16.mxu0 0
        %1195 = vmatpush1.bf16.xpose.msra.mxu0 0
        %1196 = vmatprep.subr.bf16.mxu0 0
        %1197 = vmatpush1.bf16.xpose.msra.mxu0 0
        %1198 = vmatprep.subr.bf16.mxu0 0
        %1199 = vmatpush1.bf16.xpose.msra.mxu0 0
        %1200 = vmatprep.subr.bf16.mxu0 0
        %1201 = vmatpush1.bf16.xpose.msra.mxu0 0
        %1202 = vmatprep.subr.bf16.mxu0 0
        %1203 = vmatpush1.bf16.xpose.msra.mxu0 0
        %1204 = vmatprep.subr.bf16.mxu0 0
        %1205 = vmatpush1.bf16.xpose.msra.mxu0 0
        %1206 = vmatprep.subr.bf16.mxu0 0
        %1207 = vmatpush1.bf16.xpose.msra.mxu0 0
        %1208 = vmatprep.subr.bf16.mxu0 0
        %1209 = vmatpush1.bf16.xpose.msra.mxu0 0
        %1210 = vmatprep.subr.bf16.mxu0 0
        %1211 = vmatpush1.bf16.xpose.msra.mxu0 0
        %1212 = vmatprep.subr.bf16.mxu0 0
        %1213 = vmatpush1.bf16.xpose.msra.mxu0 0
        %1214 = vmatprep.subr.bf16.mxu0 0
        %1215 = vmatpush1.bf16.xpose.msra.mxu0 0
        %1216 = vmatprep.subr.bf16.mxu0 0
        %1217 = vmatpush1.bf16.xpose.msra.mxu0 0
        %1218 = vmatprep.subr.bf16.mxu0 0
        %1219 = vmatpush1.bf16.xpose.msra.mxu0 0
        %1220 = vmatprep.mubr.bf16.mxu0 0
        %1221 = vmatmul.mubr.bf16.gmra.mrb[0].mxu0 %v1183
        %v1222 = vpop.f32.mrb[0].mxu0
        %v1223 = vadd.f32 0.0, %v1222
        %v1224 = vpop.f32.mrb[0].mxu0
        %v1225 = vpop.f32.mrb[0].mxu0
        %v1226 = vadd.f32 0.0, %v1225
        %v1227 = vpop.f32.mrb[0].mxu0
        %1228 = vdwg.mxu0
        %1229 = vrot.lane.b32.xlu0 %v922, 80
        %v1230 = vpop.permute.xlu0 %1229
        %1231 = vrot.lane.b32.xlu0 %v922, 16
        %v1232 = vpop.permute.xlu0 %1231
        %v1234 = vsel %vm927, %v1230, 0
        %v1237 = vsel %vm927, %v1232, 0
        %1239 = vmatprep.subr.bf16.mxu0 0
        %1240 = vmatpush1.bf16.xpose.msra.mxu0 %v1237
        %1241 = vmatprep.subr.bf16.mxu0 0
        %1242 = vmatpush1.bf16.xpose.msra.mxu0 0
        %1243 = vmatprep.subr.bf16.mxu0 0
        %1244 = vmatpush1.bf16.xpose.msra.mxu0 0
        %1245 = vmatprep.subr.bf16.mxu0 0
        %1246 = vmatpush1.bf16.xpose.msra.mxu0 0
        %1247 = vmatprep.subr.bf16.mxu0 0
        %1248 = vmatpush1.bf16.xpose.msra.mxu0 0
        %1249 = vmatprep.subr.bf16.mxu0 0
        %1250 = vmatpush1.bf16.xpose.msra.mxu0 0
        %1251 = vmatprep.subr.bf16.mxu0 0
        %1252 = vmatpush1.bf16.xpose.msra.mxu0 0
        %1253 = vmatprep.subr.bf16.mxu0 0
        %1254 = vmatpush1.bf16.xpose.msra.mxu0 0
        %1255 = vmatprep.subr.bf16.mxu0 0
        %1256 = vmatpush1.bf16.xpose.msra.mxu0 0
        %1257 = vmatprep.subr.bf16.mxu0 0
        %1258 = vmatpush1.bf16.xpose.msra.mxu0 0
        %1259 = vmatprep.subr.bf16.mxu0 0
        %1260 = vmatpush1.bf16.xpose.msra.mxu0 0
        %1261 = vmatprep.subr.bf16.mxu0 0
        %1262 = vmatpush1.bf16.xpose.msra.mxu0 0
        %1263 = vmatprep.subr.bf16.mxu0 0
        %1264 = vmatpush1.bf16.xpose.msra.mxu0 0
        %1265 = vmatprep.subr.bf16.mxu0 0
        %1266 = vmatpush1.bf16.xpose.msra.mxu0 0
        %1267 = vmatprep.subr.bf16.mxu0 0
        %1268 = vmatpush1.bf16.xpose.msra.mxu0 0
        %1269 = vmatprep.subr.bf16.mxu0 0
        %1270 = vmatpush1.bf16.xpose.msra.mxu0 0
        %1271 = vmatprep.mubr.bf16.mxu0 0
        %1272 = vmatmul.mubr.bf16.gmra.mrb[0].mxu0 %v1234
        %v1273 = vpop.f32.mrb[0].mxu0
        %v1274 = vadd.f32 0.0, %v1273
        %v1275 = vpop.f32.mrb[0].mxu0
        %v1276 = vpop.f32.mrb[0].mxu0
        %v1277 = vadd.f32 0.0, %v1276
        %v1278 = vpop.f32.mrb[0].mxu0
        %1279 = vdwg.mxu0
        %1280 = vrot.lane.b32.xlu0 %v923, 80
        %v1281 = vpop.permute.xlu0 %1280
        %1282 = vrot.lane.b32.xlu0 %v923, 16
        %v1283 = vpop.permute.xlu0 %1282
        %v1285 = vsel %vm927, %v1281, 0
        %v1288 = vsel %vm927, %v1283, 0
        %1290 = vmatprep.subr.bf16.mxu0 0
        %1291 = vmatpush1.bf16.xpose.msra.mxu0 %v1288
        %1292 = vmatprep.subr.bf16.mxu0 0
        %1293 = vmatpush1.bf16.xpose.msra.mxu0 0
        %1294 = vmatprep.subr.bf16.mxu0 0
        %1295 = vmatpush1.bf16.xpose.msra.mxu0 0
        %1296 = vmatprep.subr.bf16.mxu0 0
        %1297 = vmatpush1.bf16.xpose.msra.mxu0 0
        %1298 = vmatprep.subr.bf16.mxu0 0
        %1299 = vmatpush1.bf16.xpose.msra.mxu0 0
        %1300 = vmatprep.subr.bf16.mxu0 0
        %1301 = vmatpush1.bf16.xpose.msra.mxu0 0
        %1302 = vmatprep.subr.bf16.mxu0 0
        %1303 = vmatpush1.bf16.xpose.msra.mxu0 0
        %1304 = vmatprep.subr.bf16.mxu0 0
        %1305 = vmatpush1.bf16.xpose.msra.mxu0 0
        %1306 = vmatprep.subr.bf16.mxu0 0
        %1307 = vmatpush1.bf16.xpose.msra.mxu0 0
        %1308 = vmatprep.subr.bf16.mxu0 0
        %1309 = vmatpush1.bf16.xpose.msra.mxu0 0
        %1310 = vmatprep.subr.bf16.mxu0 0
        %1311 = vmatpush1.bf16.xpose.msra.mxu0 0
        %1312 = vmatprep.subr.bf16.mxu0 0
        %1313 = vmatpush1.bf16.xpose.msra.mxu0 0
        %1314 = vmatprep.subr.bf16.mxu0 0
        %1315 = vmatpush1.bf16.xpose.msra.mxu0 0
        %1316 = vmatprep.subr.bf16.mxu0 0
        %1317 = vmatpush1.bf16.xpose.msra.mxu0 0
        %1318 = vmatprep.subr.bf16.mxu0 0
        %1319 = vmatpush1.bf16.xpose.msra.mxu0 0
        %1320 = vmatprep.subr.bf16.mxu0 0
        %1321 = vmatpush1.bf16.xpose.msra.mxu0 0
        %1322 = vmatprep.mubr.bf16.mxu0 0
        %1323 = vmatmul.mubr.bf16.gmra.mrb[0].mxu0 %v1285
        %v1324 = vpop.f32.mrb[0].mxu0
        %v1325 = vadd.f32 0.0, %v1324
        %v1326 = vpop.f32.mrb[0].mxu0
        %v1327 = vpop.f32.mrb[0].mxu0
        %v1328 = vadd.f32 0.0, %v1327
        %v1329 = vpop.f32.mrb[0].mxu0
        %1330 = vdwg.mxu0
        %v1331 = vmul.f32 %v969, 0.25
        %v1332 = vmul.f32 %v972, 0.25
        %v1333 = vmul.f32 %v1070, 0.25
        %v1334 = vmul.f32 %v1073, 0.25
        %v1335 = vmul.f32 %v1172, 0.25
        %v1336 = vmul.f32 %v1175, 0.25
        %v1337 = vmul.f32 %v1274, 0.25
        %v1338 = vmul.f32 %v1277, 0.25
        %v1339 = vmul.f32 %v1019, 0.25
        %v1340 = vmul.f32 %v1022, 0.25
        %v1341 = vmul.f32 %v1121, 0.25
        %v1342 = vmul.f32 %v1124, 0.25
        %v1343 = vmul.f32 %v1223, 0.25
        %v1344 = vmul.f32 %v1226, 0.25
        %v1345 = vmul.f32 %v1325, 0.25
        %v1346 = vmul.f32 %v1328, 0.25
        %v1347 = vadd.f32 %v1331, %v798
        %v1348 = vadd.f32 %v1332, %v799
        %v1349 = vadd.f32 %v1333, %v798
        %v1350 = vadd.f32 %v1334, %v799
        %v1351 = vadd.f32 %v1335, %v798
        %v1352 = vadd.f32 %v1336, %v799
        %v1353 = vadd.f32 %v1337, %v798
        %v1354 = vadd.f32 %v1338, %v799
        %v1355 = vadd.f32 %v1339, %v798
        %v1356 = vadd.f32 %v1340, %v799
        %v1357 = vadd.f32 %v1341, %v798
        %v1358 = vadd.f32 %v1342, %v799
        %v1359 = vadd.f32 %v1343, %v798
        %v1360 = vadd.f32 %v1344, %v799
        %v1361 = vadd.f32 %v1345, %v798
        %v1362 = vadd.f32 %v1346, %v799
        %v1363 = vsel %vm927, %v1347, -inf
        %1364 = vmax.xlane.f32.xlu0 %v1363
        %v1365 = vpop.xlane.xlu0 %1364
        %v1366 = vsel %vm927, %v1348, -inf
        %1367 = vmax.xlane.f32.xlu0 %v1366
        %v1368 = vpop.xlane.xlu0 %1367
        %v1369 = vsel %vm927, %v1349, -inf
        %1370 = vmax.xlane.f32.xlu0 %v1369
        %v1371 = vpop.xlane.xlu0 %1370
        %v1372 = vsel %vm927, %v1350, -inf
        %1373 = vmax.xlane.f32.xlu0 %v1372
        %v1374 = vpop.xlane.xlu0 %1373
        %v1375 = vsel %vm927, %v1351, -inf
        %1376 = vmax.xlane.f32.xlu0 %v1375
        %v1377 = vpop.xlane.xlu0 %1376
        %v1378 = vsel %vm927, %v1352, -inf
        %1379 = vmax.xlane.f32.xlu0 %v1378
        %v1380 = vpop.xlane.xlu0 %1379
        %v1381 = vsel %vm927, %v1353, -inf
        %1382 = vmax.xlane.f32.xlu0 %v1381
        %v1383 = vpop.xlane.xlu0 %1382
        %v1384 = vsel %vm927, %v1354, -inf
        %1385 = vmax.xlane.f32.xlu0 %v1384
        %v1386 = vpop.xlane.xlu0 %1385
        %v1387 = vsel %vm927, %v1355, -inf
        %1388 = vmax.xlane.f32.xlu0 %v1387
        %v1389 = vpop.xlane.xlu0 %1388
        %v1390 = vsel %vm927, %v1356, -inf
        %1391 = vmax.xlane.f32.xlu0 %v1390
        %v1392 = vpop.xlane.xlu0 %1391
        %v1393 = vsel %vm927, %v1357, -inf
        %1394 = vmax.xlane.f32.xlu0 %v1393
        %v1395 = vpop.xlane.xlu0 %1394
        %v1396 = vsel %vm927, %v1358, -inf
        %1397 = vmax.xlane.f32.xlu0 %v1396
        %v1398 = vpop.xlane.xlu0 %1397
        %v1399 = vsel %vm927, %v1359, -inf
        %1400 = vmax.xlane.f32.xlu0 %v1399
        %v1401 = vpop.xlane.xlu0 %1400
        %v1402 = vsel %vm927, %v1360, -inf
        %1403 = vmax.xlane.f32.xlu0 %v1402
        %v1404 = vpop.xlane.xlu0 %1403
        %v1405 = vsel %vm927, %v1361, -inf
        %1406 = vmax.xlane.f32.xlu0 %v1405
        %v1407 = vpop.xlane.xlu0 %1406
        %v1408 = vsel %vm927, %v1362, -inf
        %1409 = vmax.xlane.f32.xlu0 %v1408
        %v1410 = vpop.xlane.xlu0 %1409
        %v1411 = vsub.f32 %v1347, %v1365
        %v1412 = vsub.f32 %v1348, %v1368
        %v1413 = vsub.f32 %v1349, %v1371
        %v1414 = vsub.f32 %v1350, %v1374
        %v1415 = vsub.f32 %v1351, %v1377
        %v1416 = vsub.f32 %v1352, %v1380
        %v1417 = vsub.f32 %v1353, %v1383
        %v1418 = vsub.f32 %v1354, %v1386
        %v1419 = vsub.f32 %v1355, %v1389
        %v1420 = vsub.f32 %v1356, %v1392
        %v1421 = vsub.f32 %v1357, %v1395
        %v1422 = vsub.f32 %v1358, %v1398
        %v1423 = vsub.f32 %v1359, %v1401
        %v1424 = vsub.f32 %v1360, %v1404
        %v1425 = vsub.f32 %v1361, %v1407
        %v1426 = vsub.f32 %v1362, %v1410
        %v1427 = vmul.f32 %v1411, 1.442695
        %v1428 = vpow.pop %v1427
        %v1429 = vmul.f32 %v1412, 1.442695
        %v1430 = vpow.pop %v1429
        %v1431 = vmul.f32 %v1413, 1.442695
        %v1432 = vpow.pop %v1431
        %v1433 = vmul.f32 %v1414, 1.442695
        %v1434 = vpow.pop %v1433
        %v1435 = vmul.f32 %v1415, 1.442695
        %v1436 = vpow.pop %v1435
        %v1437 = vmul.f32 %v1416, 1.442695
        %v1438 = vpow.pop %v1437
        %v1439 = vmul.f32 %v1417, 1.442695
        %v1440 = vpow.pop %v1439
        %v1441 = vmul.f32 %v1418, 1.442695
        %v1442 = vpow.pop %v1441
        %v1443 = vmul.f32 %v1419, 1.442695
        %v1444 = vpow.pop %v1443
        %v1445 = vmul.f32 %v1420, 1.442695
        %v1446 = vpow.pop %v1445
        %v1447 = vmul.f32 %v1421, 1.442695
        %v1448 = vpow.pop %v1447
        %v1449 = vmul.f32 %v1422, 1.442695
        %v1450 = vpow.pop %v1449
        %v1451 = vmul.f32 %v1423, 1.442695
        %v1452 = vpow.pop %v1451
        %v1453 = vmul.f32 %v1424, 1.442695
        %v1454 = vpow.pop %v1453
        %v1455 = vmul.f32 %v1425, 1.442695
        %v1456 = vpow.pop %v1455
        %v1457 = vmul.f32 %v1426, 1.442695
        %v1458 = vpow.pop %v1457
        %v1459 = vsel %vm927, %v1428, 0.0
        %1460 = vadd.xlane.f32.xlu0 %v1459
        %v1461 = vpop.xlane.xlu0 %1460
        %v1462 = vsel %vm927, %v1430, 0.0
        %1463 = vadd.xlane.f32.xlu0 %v1462
        %v1464 = vpop.xlane.xlu0 %1463
        %v1465 = vsel %vm927, %v1432, 0.0
        %1466 = vadd.xlane.f32.xlu0 %v1465
        %v1467 = vpop.xlane.xlu0 %1466
        %v1468 = vsel %vm927, %v1434, 0.0
        %1469 = vadd.xlane.f32.xlu0 %v1468
        %v1470 = vpop.xlane.xlu0 %1469
        %v1471 = vsel %vm927, %v1436, 0.0
        %1472 = vadd.xlane.f32.xlu0 %v1471
        %v1473 = vpop.xlane.xlu0 %1472
        %v1474 = vsel %vm927, %v1438, 0.0
        %1475 = vadd.xlane.f32.xlu0 %v1474
        %v1476 = vpop.xlane.xlu0 %1475
        %v1477 = vsel %vm927, %v1440, 0.0
        %1478 = vadd.xlane.f32.xlu0 %v1477
        %v1479 = vpop.xlane.xlu0 %1478
        %v1480 = vsel %vm927, %v1442, 0.0
        %1481 = vadd.xlane.f32.xlu0 %v1480
        %v1482 = vpop.xlane.xlu0 %1481
        %v1483 = vsel %vm927, %v1444, 0.0
        %1484 = vadd.xlane.f32.xlu0 %v1483
        %v1485 = vpop.xlane.xlu0 %1484
        %v1486 = vsel %vm927, %v1446, 0.0
        %1487 = vadd.xlane.f32.xlu0 %v1486
        %v1488 = vpop.xlane.xlu0 %1487
        %v1489 = vsel %vm927, %v1448, 0.0
        %1490 = vadd.xlane.f32.xlu0 %v1489
        %v1491 = vpop.xlane.xlu0 %1490
        %v1492 = vsel %vm927, %v1450, 0.0
        %1493 = vadd.xlane.f32.xlu0 %v1492
        %v1494 = vpop.xlane.xlu0 %1493
        %v1495 = vsel %vm927, %v1452, 0.0
        %1496 = vadd.xlane.f32.xlu0 %v1495
        %v1497 = vpop.xlane.xlu0 %1496
        %v1498 = vsel %vm927, %v1454, 0.0
        %1499 = vadd.xlane.f32.xlu0 %v1498
        %v1500 = vpop.xlane.xlu0 %1499
        %v1501 = vsel %vm927, %v1456, 0.0
        %1502 = vadd.xlane.f32.xlu0 %v1501
        %v1503 = vpop.xlane.xlu0 %1502
        %v1504 = vsel %vm927, %v1458, 0.0
        %1505 = vadd.xlane.f32.xlu0 %v1504
        %v1506 = vpop.xlane.xlu0 %1505
        %v1507 = vrcp.pop %v1461
        %v1508 = vrcp.pop %v1464
        %v1509 = vrcp.pop %v1467
        %v1510 = vrcp.pop %v1470
        %v1511 = vrcp.pop %v1473
        %v1512 = vrcp.pop %v1476
        %v1513 = vrcp.pop %v1479
        %v1514 = vrcp.pop %v1482
        %v1515 = vrcp.pop %v1485
        %v1516 = vrcp.pop %v1488
        %v1517 = vrcp.pop %v1491
        %v1518 = vrcp.pop %v1494
        %v1519 = vrcp.pop %v1497
        %v1520 = vrcp.pop %v1500
        %v1521 = vrcp.pop %v1503
        %v1522 = vrcp.pop %v1506
        %v1523 = vmul.f32 %v1428, %v1507
        %v1524 = vmul.f32 %v1430, %v1508
        %v1525 = vmul.f32 %v1432, %v1509
        %v1526 = vmul.f32 %v1434, %v1510
        %v1527 = vmul.f32 %v1436, %v1511
        %v1528 = vmul.f32 %v1438, %v1512
        %v1529 = vmul.f32 %v1440, %v1513
        %v1530 = vmul.f32 %v1442, %v1514
        %v1531 = vmul.f32 %v1444, %v1515
        %v1532 = vmul.f32 %v1446, %v1516
        %v1533 = vmul.f32 %v1448, %v1517
        %v1534 = vmul.f32 %v1450, %v1518
        %v1535 = vmul.f32 %v1452, %v1519
        %v1536 = vmul.f32 %v1454, %v1520
        %v1537 = vmul.f32 %v1456, %v1521
        %v1538 = vmul.f32 %v1458, %v1522
        %v1539 = vpack.c.bf16 %v1524, %v1523
        %v1540 = vpack.c.bf16 %v1526, %v1525
        %v1541 = vpack.c.bf16 %v1528, %v1527
        %v1542 = vpack.c.bf16 %v1530, %v1529
        %v1543 = vpack.c.bf16 %v1532, %v1531
        %v1544 = vpack.c.bf16 %v1534, %v1533
        %v1545 = vpack.c.bf16 %v1536, %v1535
        %v1546 = vpack.c.bf16 %v1538, %v1537
        %v1547 = vpack.c.bf16 %v910, %v906
        %v1548 = vpack.c.bf16 %v920, %v916
        %v1550 = vsel %vm927, %v1539, 0
        %1552 = vmatprep.subr.bf16.mxu0 0
        %1553 = vmatpush1.bf16.msra.mxu0 %v1547
        %1554 = vmatprep.subr.bf16.mxu0 0
        %1555 = vmatpush1.bf16.msra.mxu0 0
        %1556 = vmatprep.subr.bf16.mxu0 0
        %1557 = vmatpush1.bf16.msra.mxu0 0
        %1558 = vmatprep.subr.bf16.mxu0 0
        %1559 = vmatpush1.bf16.msra.mxu0 0
        %1560 = vmatprep.subr.bf16.mxu0 0
        %1561 = vmatpush1.bf16.msra.mxu0 0
        %1562 = vmatprep.subr.bf16.mxu0 0
        %1563 = vmatpush1.bf16.msra.mxu0 0
        %1564 = vmatprep.subr.bf16.mxu0 0
        %1565 = vmatpush1.bf16.msra.mxu0 0
        %1566 = vmatprep.subr.bf16.mxu0 0
        %1567 = vmatpush1.bf16.msra.mxu0 0
        %1568 = vmatprep.subr.bf16.mxu0 0
        %1569 = vmatpush1.bf16.msra.mxu0 0
        %1570 = vmatprep.subr.bf16.mxu0 0
        %1571 = vmatpush1.bf16.msra.mxu0 0
        %1572 = vmatprep.subr.bf16.mxu0 0
        %1573 = vmatpush1.bf16.msra.mxu0 0
        %1574 = vmatprep.subr.bf16.mxu0 0
        %1575 = vmatpush1.bf16.msra.mxu0 0
        %1576 = vmatprep.subr.bf16.mxu0 0
        %1577 = vmatpush1.bf16.msra.mxu0 0
        %1578 = vmatprep.subr.bf16.mxu0 0
        %1579 = vmatpush1.bf16.msra.mxu0 0
        %1580 = vmatprep.subr.bf16.mxu0 0
        %1581 = vmatpush1.bf16.msra.mxu0 0
        %1582 = vmatprep.subr.bf16.mxu0 0
        %1583 = vmatpush1.bf16.msra.mxu0 0
        %1584 = vmatprep.mubr.bf16.mxu0 0
        %1585 = vmatmul.mubr.bf16.gmra.mrb[0].mxu0 %v1550
        %v1586 = vpop.f32.mrb[0].mxu0
        %v1587 = vadd.f32 0.0, %v1586
        %v1588 = vpop.f32.mrb[0].mxu0
        %v1589 = vpop.f32.mrb[0].mxu0
        %v1590 = vadd.f32 0.0, %v1589
        %v1591 = vpop.f32.mrb[0].mxu0
        %1592 = vdwg.mxu0
        %v1594 = vsel %vm927, %v1543, 0
        %1596 = vmatprep.subr.bf16.mxu0 0
        %1597 = vmatpush1.bf16.msra.mxu0 %v1548
        %1598 = vmatprep.subr.bf16.mxu0 0
        %1599 = vmatpush1.bf16.msra.mxu0 0
        %1600 = vmatprep.subr.bf16.mxu0 0
        %1601 = vmatpush1.bf16.msra.mxu0 0
        %1602 = vmatprep.subr.bf16.mxu0 0
        %1603 = vmatpush1.bf16.msra.mxu0 0
        %1604 = vmatprep.subr.bf16.mxu0 0
        %1605 = vmatpush1.bf16.msra.mxu0 0
        %1606 = vmatprep.subr.bf16.mxu0 0
        %1607 = vmatpush1.bf16.msra.mxu0 0
        %1608 = vmatprep.subr.bf16.mxu0 0
        %1609 = vmatpush1.bf16.msra.mxu0 0
        %1610 = vmatprep.subr.bf16.mxu0 0
        %1611 = vmatpush1.bf16.msra.mxu0 0
        %1612 = vmatprep.subr.bf16.mxu0 0
        %1613 = vmatpush1.bf16.msra.mxu0 0
        %1614 = vmatprep.subr.bf16.mxu0 0
        %1615 = vmatpush1.bf16.msra.mxu0 0
        %1616 = vmatprep.subr.bf16.mxu0 0
        %1617 = vmatpush1.bf16.msra.mxu0 0
        %1618 = vmatprep.subr.bf16.mxu0 0
        %1619 = vmatpush1.bf16.msra.mxu0 0
        %1620 = vmatprep.subr.bf16.mxu0 0
        %1621 = vmatpush1.bf16.msra.mxu0 0
        %1622 = vmatprep.subr.bf16.mxu0 0
        %1623 = vmatpush1.bf16.msra.mxu0 0
        %1624 = vmatprep.subr.bf16.mxu0 0
        %1625 = vmatpush1.bf16.msra.mxu0 0
        %1626 = vmatprep.subr.bf16.mxu0 0
        %1627 = vmatpush1.bf16.msra.mxu0 0
        %1628 = vmatprep.mubr.bf16.mxu0 0
        %1629 = vmatmul.mubr.bf16.gmra.mrb[0].mxu0 %v1594
        %v1630 = vpop.f32.mrb[0].mxu0
        %v1631 = vadd.f32 0.0, %v1630
        %v1632 = vpop.f32.mrb[0].mxu0
        %v1633 = vpop.f32.mrb[0].mxu0
        %v1634 = vadd.f32 0.0, %v1633
        %v1635 = vpop.f32.mrb[0].mxu0
        %1636 = vdwg.mxu0
        %1638 = vrot.lane.b32.xlu0 %v1547, 112
        %v1639 = vpop.permute.xlu0 %1638
        %v1642 = vsel %vm927, %v1540, 0
        %1644 = vmatprep.subr.bf16.mxu0 0
        %1645 = vmatpush1.bf16.msra.mxu0 %v1639
        %1646 = vmatprep.subr.bf16.mxu0 0
        %1647 = vmatpush1.bf16.msra.mxu0 0
        %1648 = vmatprep.subr.bf16.mxu0 0
        %1649 = vmatpush1.bf16.msra.mxu0 0
        %1650 = vmatprep.subr.bf16.mxu0 0
        %1651 = vmatpush1.bf16.msra.mxu0 0
        %1652 = vmatprep.subr.bf16.mxu0 0
        %1653 = vmatpush1.bf16.msra.mxu0 0
        %1654 = vmatprep.subr.bf16.mxu0 0
        %1655 = vmatpush1.bf16.msra.mxu0 0
        %1656 = vmatprep.subr.bf16.mxu0 0
        %1657 = vmatpush1.bf16.msra.mxu0 0
        %1658 = vmatprep.subr.bf16.mxu0 0
        %1659 = vmatpush1.bf16.msra.mxu0 0
        %1660 = vmatprep.subr.bf16.mxu0 0
        %1661 = vmatpush1.bf16.msra.mxu0 0
        %1662 = vmatprep.subr.bf16.mxu0 0
        %1663 = vmatpush1.bf16.msra.mxu0 0
        %1664 = vmatprep.subr.bf16.mxu0 0
        %1665 = vmatpush1.bf16.msra.mxu0 0
        %1666 = vmatprep.subr.bf16.mxu0 0
        %1667 = vmatpush1.bf16.msra.mxu0 0
        %1668 = vmatprep.subr.bf16.mxu0 0
        %1669 = vmatpush1.bf16.msra.mxu0 0
        %1670 = vmatprep.subr.bf16.mxu0 0
        %1671 = vmatpush1.bf16.msra.mxu0 0
        %1672 = vmatprep.subr.bf16.mxu0 0
        %1673 = vmatpush1.bf16.msra.mxu0 0
        %1674 = vmatprep.subr.bf16.mxu0 0
        %1675 = vmatpush1.bf16.msra.mxu0 0
        %1676 = vmatprep.mubr.bf16.mxu0 0
        %1677 = vmatmul.mubr.bf16.gmra.mrb[0].mxu0 %v1642
        %v1678 = vpop.f32.mrb[0].mxu0
        %v1679 = vadd.f32 0.0, %v1678
        %v1680 = vpop.f32.mrb[0].mxu0
        %v1681 = vpop.f32.mrb[0].mxu0
        %v1682 = vadd.f32 0.0, %v1681
        %v1683 = vpop.f32.mrb[0].mxu0
        %1684 = vdwg.mxu0
        %1686 = vrot.lane.b32.xlu0 %v1548, 112
        %v1687 = vpop.permute.xlu0 %1686
        %v1690 = vsel %vm927, %v1544, 0
        %1692 = vmatprep.subr.bf16.mxu0 0
        %1693 = vmatpush1.bf16.msra.mxu0 %v1687
        %1694 = vmatprep.subr.bf16.mxu0 0
        %1695 = vmatpush1.bf16.msra.mxu0 0
        %1696 = vmatprep.subr.bf16.mxu0 0
        %1697 = vmatpush1.bf16.msra.mxu0 0
        %1698 = vmatprep.subr.bf16.mxu0 0
        %1699 = vmatpush1.bf16.msra.mxu0 0
        %1700 = vmatprep.subr.bf16.mxu0 0
        %1701 = vmatpush1.bf16.msra.mxu0 0
        %1702 = vmatprep.subr.bf16.mxu0 0
        %1703 = vmatpush1.bf16.msra.mxu0 0
        %1704 = vmatprep.subr.bf16.mxu0 0
        %1705 = vmatpush1.bf16.msra.mxu0 0
        %1706 = vmatprep.subr.bf16.mxu0 0
        %1707 = vmatpush1.bf16.msra.mxu0 0
        %1708 = vmatprep.subr.bf16.mxu0 0
        %1709 = vmatpush1.bf16.msra.mxu0 0
        %1710 = vmatprep.subr.bf16.mxu0 0
        %1711 = vmatpush1.bf16.msra.mxu0 0
        %1712 = vmatprep.subr.bf16.mxu0 0
        %1713 = vmatpush1.bf16.msra.mxu0 0
        %1714 = vmatprep.subr.bf16.mxu0 0
        %1715 = vmatpush1.bf16.msra.mxu0 0
        %1716 = vmatprep.subr.bf16.mxu0 0
        %1717 = vmatpush1.bf16.msra.mxu0 0
        %1718 = vmatprep.subr.bf16.mxu0 0
        %1719 = vmatpush1.bf16.msra.mxu0 0
        %1720 = vmatprep.subr.bf16.mxu0 0
        %1721 = vmatpush1.bf16.msra.mxu0 0
        %1722 = vmatprep.subr.bf16.mxu0 0
        %1723 = vmatpush1.bf16.msra.mxu0 0
        %1724 = vmatprep.mubr.bf16.mxu0 0
        %1725 = vmatmul.mubr.bf16.gmra.mrb[0].mxu0 %v1690
        %v1726 = vpop.f32.mrb[0].mxu0
        %v1727 = vadd.f32 0.0, %v1726
        %v1728 = vpop.f32.mrb[0].mxu0
        %v1729 = vpop.f32.mrb[0].mxu0
        %v1730 = vadd.f32 0.0, %v1729
        %v1731 = vpop.f32.mrb[0].mxu0
        %1732 = vdwg.mxu0
        %1733 = vrot.lane.b32.xlu0 %v1547, 96
        %v1734 = vpop.permute.xlu0 %1733
        %v1737 = vsel %vm927, %v1541, 0
        %1739 = vmatprep.subr.bf16.mxu0 0
        %1740 = vmatpush1.bf16.msra.mxu0 %v1734
        %1741 = vmatprep.subr.bf16.mxu0 0
        %1742 = vmatpush1.bf16.msra.mxu0 0
        %1743 = vmatprep.subr.bf16.mxu0 0
        %1744 = vmatpush1.bf16.msra.mxu0 0
        %1745 = vmatprep.subr.bf16.mxu0 0
        %1746 = vmatpush1.bf16.msra.mxu0 0
        %1747 = vmatprep.subr.bf16.mxu0 0
        %1748 = vmatpush1.bf16.msra.mxu0 0
        %1749 = vmatprep.subr.bf16.mxu0 0
        %1750 = vmatpush1.bf16.msra.mxu0 0
        %1751 = vmatprep.subr.bf16.mxu0 0
        %1752 = vmatpush1.bf16.msra.mxu0 0
        %1753 = vmatprep.subr.bf16.mxu0 0
        %1754 = vmatpush1.bf16.msra.mxu0 0
        %1755 = vmatprep.subr.bf16.mxu0 0
        %1756 = vmatpush1.bf16.msra.mxu0 0
        %1757 = vmatprep.subr.bf16.mxu0 0
        %1758 = vmatpush1.bf16.msra.mxu0 0
        %1759 = vmatprep.subr.bf16.mxu0 0
        %1760 = vmatpush1.bf16.msra.mxu0 0
        %1761 = vmatprep.subr.bf16.mxu0 0
        %1762 = vmatpush1.bf16.msra.mxu0 0
        %1763 = vmatprep.subr.bf16.mxu0 0
        %1764 = vmatpush1.bf16.msra.mxu0 0
        %1765 = vmatprep.subr.bf16.mxu0 0
        %1766 = vmatpush1.bf16.msra.mxu0 0
        %1767 = vmatprep.subr.bf16.mxu0 0
        %1768 = vmatpush1.bf16.msra.mxu0 0
        %1769 = vmatprep.subr.bf16.mxu0 0
        %1770 = vmatpush1.bf16.msra.mxu0 0
        %1771 = vmatprep.mubr.bf16.mxu0 0
        %1772 = vmatmul.mubr.bf16.gmra.mrb[0].mxu0 %v1737
        %v1773 = vpop.f32.mrb[0].mxu0
        %v1774 = vadd.f32 0.0, %v1773
        %v1775 = vpop.f32.mrb[0].mxu0
        %v1776 = vpop.f32.mrb[0].mxu0
        %v1777 = vadd.f32 0.0, %v1776
        %v1778 = vpop.f32.mrb[0].mxu0
        %1779 = vdwg.mxu0
        %1780 = vrot.lane.b32.xlu0 %v1548, 96
        %v1781 = vpop.permute.xlu0 %1780
        %v1784 = vsel %vm927, %v1545, 0
        %1786 = vmatprep.subr.bf16.mxu0 0
        %1787 = vmatpush1.bf16.msra.mxu0 %v1781
        %1788 = vmatprep.subr.bf16.mxu0 0
        %1789 = vmatpush1.bf16.msra.mxu0 0
        %1790 = vmatprep.subr.bf16.mxu0 0
        %1791 = vmatpush1.bf16.msra.mxu0 0
        %1792 = vmatprep.subr.bf16.mxu0 0
        %1793 = vmatpush1.bf16.msra.mxu0 0
        %1794 = vmatprep.subr.bf16.mxu0 0
        %1795 = vmatpush1.bf16.msra.mxu0 0
        %1796 = vmatprep.subr.bf16.mxu0 0
        %1797 = vmatpush1.bf16.msra.mxu0 0
        %1798 = vmatprep.subr.bf16.mxu0 0
        %1799 = vmatpush1.bf16.msra.mxu0 0
        %1800 = vmatprep.subr.bf16.mxu0 0
        %1801 = vmatpush1.bf16.msra.mxu0 0
        %1802 = vmatprep.subr.bf16.mxu0 0
        %1803 = vmatpush1.bf16.msra.mxu0 0
        %1804 = vmatprep.subr.bf16.mxu0 0
        %1805 = vmatpush1.bf16.msra.mxu0 0
        %1806 = vmatprep.subr.bf16.mxu0 0
        %1807 = vmatpush1.bf16.msra.mxu0 0
        %1808 = vmatprep.subr.bf16.mxu0 0
        %1809 = vmatpush1.bf16.msra.mxu0 0
        %1810 = vmatprep.subr.bf16.mxu0 0
        %1811 = vmatpush1.bf16.msra.mxu0 0
        %1812 = vmatprep.subr.bf16.mxu0 0
        %1813 = vmatpush1.bf16.msra.mxu0 0
        %1814 = vmatprep.subr.bf16.mxu0 0
        %1815 = vmatpush1.bf16.msra.mxu0 0
        %1816 = vmatprep.subr.bf16.mxu0 0
        %1817 = vmatpush1.bf16.msra.mxu0 0
        %1818 = vmatprep.mubr.bf16.mxu0 0
        %1819 = vmatmul.mubr.bf16.gmra.mrb[0].mxu0 %v1784
        %v1820 = vpop.f32.mrb[0].mxu0
        %v1821 = vadd.f32 0.0, %v1820
        %v1822 = vpop.f32.mrb[0].mxu0
        %v1823 = vpop.f32.mrb[0].mxu0
        %v1824 = vadd.f32 0.0, %v1823
        %v1825 = vpop.f32.mrb[0].mxu0
        %1826 = vdwg.mxu0
        %1827 = vrot.lane.b32.xlu0 %v1547, 80
        %v1828 = vpop.permute.xlu0 %1827
        %v1831 = vsel %vm927, %v1542, 0
        %1833 = vmatprep.subr.bf16.mxu0 0
        %1834 = vmatpush1.bf16.msra.mxu0 %v1828
        %1835 = vmatprep.subr.bf16.mxu0 0
        %1836 = vmatpush1.bf16.msra.mxu0 0
        %1837 = vmatprep.subr.bf16.mxu0 0
        %1838 = vmatpush1.bf16.msra.mxu0 0
        %1839 = vmatprep.subr.bf16.mxu0 0
        %1840 = vmatpush1.bf16.msra.mxu0 0
        %1841 = vmatprep.subr.bf16.mxu0 0
        %1842 = vmatpush1.bf16.msra.mxu0 0
        %1843 = vmatprep.subr.bf16.mxu0 0
        %1844 = vmatpush1.bf16.msra.mxu0 0
        %1845 = vmatprep.subr.bf16.mxu0 0
        %1846 = vmatpush1.bf16.msra.mxu0 0
        %1847 = vmatprep.subr.bf16.mxu0 0
        %1848 = vmatpush1.bf16.msra.mxu0 0
        %1849 = vmatprep.subr.bf16.mxu0 0
        %1850 = vmatpush1.bf16.msra.mxu0 0
        %1851 = vmatprep.subr.bf16.mxu0 0
        %1852 = vmatpush1.bf16.msra.mxu0 0
        %1853 = vmatprep.subr.bf16.mxu0 0
        %1854 = vmatpush1.bf16.msra.mxu0 0
        %1855 = vmatprep.subr.bf16.mxu0 0
        %1856 = vmatpush1.bf16.msra.mxu0 0
        %1857 = vmatprep.subr.bf16.mxu0 0
        %1858 = vmatpush1.bf16.msra.mxu0 0
        %1859 = vmatprep.subr.bf16.mxu0 0
        %1860 = vmatpush1.bf16.msra.mxu0 0
        %1861 = vmatprep.subr.bf16.mxu0 0
        %1862 = vmatpush1.bf16.msra.mxu0 0
        %1863 = vmatprep.subr.bf16.mxu0 0
        %1864 = vmatpush1.bf16.msra.mxu0 0
        %1865 = vmatprep.mubr.bf16.mxu0 0
        %1866 = vmatmul.mubr.bf16.gmra.mrb[0].mxu0 %v1831
        %v1867 = vpop.f32.mrb[0].mxu0
        %v1868 = vadd.f32 0.0, %v1867
        %v1869 = vpop.f32.mrb[0].mxu0
        %v1870 = vpop.f32.mrb[0].mxu0
        %v1871 = vadd.f32 0.0, %v1870
        %v1872 = vpop.f32.mrb[0].mxu0
        %1873 = vdwg.mxu0
        %1874 = vrot.lane.b32.xlu0 %v1548, 80
        %v1875 = vpop.permute.xlu0 %1874
        %v1878 = vsel %vm927, %v1546, 0
        %1880 = vmatprep.subr.bf16.mxu0 0
        %1881 = vmatpush1.bf16.msra.mxu0 %v1875
        %1882 = vmatprep.subr.bf16.mxu0 0
        %1883 = vmatpush1.bf16.msra.mxu0 0
        %1884 = vmatprep.subr.bf16.mxu0 0
        %1885 = vmatpush1.bf16.msra.mxu0 0
        %1886 = vmatprep.subr.bf16.mxu0 0
        %1887 = vmatpush1.bf16.msra.mxu0 0
        %1888 = vmatprep.subr.bf16.mxu0 0
        %1889 = vmatpush1.bf16.msra.mxu0 0
        %1890 = vmatprep.subr.bf16.mxu0 0
        %1891 = vmatpush1.bf16.msra.mxu0 0
        %1892 = vmatprep.subr.bf16.mxu0 0
        %1893 = vmatpush1.bf16.msra.mxu0 0
        %1894 = vmatprep.subr.bf16.mxu0 0
        %1895 = vmatpush1.bf16.msra.mxu0 0
        %1896 = vmatprep.subr.bf16.mxu0 0
        %1897 = vmatpush1.bf16.msra.mxu0 0
        %1898 = vmatprep.subr.bf16.mxu0 0
        %1899 = vmatpush1.bf16.msra.mxu0 0
        %1900 = vmatprep.subr.bf16.mxu0 0
        %1901 = vmatpush1.bf16.msra.mxu0 0
        %1902 = vmatprep.subr.bf16.mxu0 0
        %1903 = vmatpush1.bf16.msra.mxu0 0
        %1904 = vmatprep.subr.bf16.mxu0 0
        %1905 = vmatpush1.bf16.msra.mxu0 0
        %1906 = vmatprep.subr.bf16.mxu0 0
        %1907 = vmatpush1.bf16.msra.mxu0 0
        %1908 = vmatprep.subr.bf16.mxu0 0
        %1909 = vmatpush1.bf16.msra.mxu0 0
        %1910 = vmatprep.subr.bf16.mxu0 0
        %1911 = vmatpush1.bf16.msra.mxu0 0
        %1912 = vmatprep.mubr.bf16.mxu0 0
        %1913 = vmatmul.mubr.bf16.gmra.mrb[0].mxu0 %v1878
        %v1914 = vpop.f32.mrb[0].mxu0
        %v1915 = vadd.f32 0.0, %v1914
        %v1916 = vpop.f32.mrb[0].mxu0
        %v1917 = vpop.f32.mrb[0].mxu0
        %v1918 = vadd.f32 0.0, %v1917
        %v1919 = vpop.f32.mrb[0].mxu0
        %1920 = vdwg.mxu0
        %1925 = vrot.lane.b32.xlu0 %v1679, 16
        %v1926 = vpop.permute.xlu0 %1925
        %1927 = vrot.lane.b32.xlu0 %v1682, 16
        %v1928 = vpop.permute.xlu0 %1927
        %1929 = vrot.lane.b32.xlu0 %v1727, 16
        %v1930 = vpop.permute.xlu0 %1929
        %1931 = vrot.lane.b32.xlu0 %v1730, 16
        %v1932 = vpop.permute.xlu0 %1931
        %1941 = vrot.lane.b32.xlu0 %v1774, 32
        %v1942 = vpop.permute.xlu0 %1941
        %1943 = vrot.lane.b32.xlu0 %v1777, 32
        %v1944 = vpop.permute.xlu0 %1943
        %1945 = vrot.lane.b32.xlu0 %v1821, 32
        %v1946 = vpop.permute.xlu0 %1945
        %1947 = vrot.lane.b32.xlu0 %v1824, 32
        %v1948 = vpop.permute.xlu0 %1947
        %1957 = vrot.lane.b32.xlu0 %v1868, 48
        %v1958 = vpop.permute.xlu0 %1957
        %1959 = vrot.lane.b32.xlu0 %v1871, 48
        %v1960 = vpop.permute.xlu0 %1959
        %1961 = vrot.lane.b32.xlu0 %v1915, 48
        %v1962 = vpop.permute.xlu0 %1961
        %1963 = vrot.lane.b32.xlu0 %v1918, 48
        %v1964 = vpop.permute.xlu0 %1963
        %v1969 = vsel %vm927, %v1587, %v1926
        %v1970 = vsel %vm927, %v1590, %v1928
        %v1971 = vsel %vm927, %v1631, %v1930
        %v1972 = vsel %vm927, %v1634, %v1932
        %vm1973 = vcmask 261120
        %v1974 = vsel %vm1973, %v1969, %v1942
        %v1975 = vsel %vm1973, %v1970, %v1944
        %v1976 = vsel %vm1973, %v1971, %v1946
        %v1977 = vsel %vm1973, %v1972, %v1948
        %vm1978 = vcmask 392192
        %v1979 = vsel %vm1978, %v1974, %v1958
        %v1980 = vsel %vm1978, %v1975, %v1960
        %v1981 = vsel %vm1978, %v1976, %v1962
        %v1982 = vsel %vm1978, %v1977, %v1964
        %v1983 = vld [vmem:[%s625] sm:$0xf]
        %v1984 = vld [vmem:[%s625 + $0x4] sm:$0xf]
        %v1985 = vld [vmem:[%s625 + $0x8] sm:$0xf]
        %v1986 = vld [vmem:[%s625 + $0xc] sm:$0xf]
        %v1987 = vld [vmem:[%s625 + $0x10] sm:$0xf]
        %v1988 = vld [vmem:[%s625 + $0x14] sm:$0xf]
        %v1989 = vld [vmem:[%s625 + $0x18] sm:$0xf]
        %v1990 = vld [vmem:[%s625 + $0x1c] sm:$0xf]
        %v1991 = vpack.c.bf16 %v1980, %v1979
        %v1992 = vpack.c.bf16 %v1982, %v1981
        %v1993 = vld [vmem:[%s745] sm:$0x1]
        %v1995 = vlaneseq
        %v1996 = vshrl.u32 %v1995, 7
        %v1997 = vsub.s32 0, %v1996
        %v1998 = vrot.slane %v1993, %v1997
        %v2008 = vunpack.c.l.b16 %v1983
        %v2009 = vunpack.c.l.b16 %v1984
        %v2010 = vunpack.c.l.b16 %v1985
        %v2011 = vunpack.c.l.b16 %v1986
        %v2012 = vunpack.c.l.b16 %v1987
        %v2013 = vunpack.c.l.b16 %v1988
        %v2014 = vunpack.c.l.b16 %v1989
        %v2015 = vunpack.c.l.b16 %v1990
        %v2016 = vpack.c.b16 %v2009, %v2008
        %v2017 = vpack.c.b16 %v2011, %v2010
        %v2018 = vpack.c.b16 %v2013, %v2012
        %v2019 = vpack.c.b16 %v2015, %v2014
        %v2025 = vsel %vm862, %v1991, 0
        %v2028 = vsel %vm862, %v1992, 0
        %2030 = vmatprep.subr.bf16.mxu0 0
        %2031 = vmatpush1.bf16.msra.mxu0 %v2016
        %2032 = vmatprep.subr.bf16.mxu0 0
        %2033 = vmatpush1.bf16.msra.mxu0 %v2017
        %2034 = vmatprep.subr.bf16.mxu0 0
        %2035 = vmatpush1.bf16.msra.mxu0 %v2018
        %2036 = vmatprep.subr.bf16.mxu0 0
        %2037 = vmatpush1.bf16.msra.mxu0 %v2019
        %2038 = vmatprep.subr.bf16.mxu0 0
        %2039 = vmatpush1.bf16.msra.mxu0 0
        %2040 = vmatprep.subr.bf16.mxu0 0
        %2041 = vmatpush1.bf16.msra.mxu0 0
        %2042 = vmatprep.subr.bf16.mxu0 0
        %2043 = vmatpush1.bf16.msra.mxu0 0
        %2044 = vmatprep.subr.bf16.mxu0 0
        %2045 = vmatpush1.bf16.msra.mxu0 0
        %2046 = vmatprep.subr.bf16.mxu0 0
        %2047 = vmatpush1.bf16.msra.mxu0 0
        %2048 = vmatprep.subr.bf16.mxu0 0
        %2049 = vmatpush1.bf16.msra.mxu0 0
        %2050 = vmatprep.subr.bf16.mxu0 0
        %2051 = vmatpush1.bf16.msra.mxu0 0
        %2052 = vmatprep.subr.bf16.mxu0 0
        %2053 = vmatpush1.bf16.msra.mxu0 0
        %2054 = vmatprep.subr.bf16.mxu0 0
        %2055 = vmatpush1.bf16.msra.mxu0 0
        %2056 = vmatprep.subr.bf16.mxu0 0
        %2057 = vmatpush1.bf16.msra.mxu0 0
        %2058 = vmatprep.subr.bf16.mxu0 0
        %2059 = vmatpush1.bf16.msra.mxu0 0
        %2060 = vmatprep.subr.bf16.mxu0 0
        %2061 = vmatpush1.bf16.msra.mxu0 0
        %2062 = vmatprep.mubr.bf16.mxu0 0
        %2063 = vmatmul.mubr.bf16.gmra.mrb[0].mxu0 %v2025
        %v2064 = vpop.f32.mrb[0].mxu0
        %v2065 = vadd.f32 %v1998, %v2064
        %v2066 = vpop.f32.mrb[0].mxu0
        %v2067 = vpop.f32.mrb[0].mxu0
        %v2068 = vadd.f32 %v1998, %v2067
        %v2069 = vpop.f32.mrb[0].mxu0
        %2070 = vmatprep.mubr.bf16.mxu0 0
        %2071 = vmatmul.mubr.bf16.gmra.mrb[0].mxu0 %v2028
        %v2072 = vpop.f32.mrb[0].mxu0
        %v2073 = vadd.f32 %v1998, %v2072
        %v2074 = vpop.f32.mrb[0].mxu0
        %v2075 = vpop.f32.mrb[0].mxu0
        %v2076 = vadd.f32 %v1998, %v2075
        %v2077 = vpop.f32.mrb[0].mxu0
        %2078 = vdwg.mxu0
        %v2079 = vadd.f32 %v794, %v2065
        %v2080 = vadd.f32 %v795, %v2068
        %v2081 = vadd.f32 %v796, %v2073
        %v2082 = vadd.f32 %v797, %v2076
        %v2083 = vld [vmem:[%s748] sm:$0x1]
        %v2084 = vld [vmem:[%s751] sm:$0x1]
        %v2085 = vsel %vm862, %v2079, 0.0
        %2086 = vadd.xlane.f32.xlu0 %v2085
        %v2087 = vpop.xlane.xlu0 %2086
        %v2088 = vsel %vm862, %v2080, 0.0
        %2089 = vadd.xlane.f32.xlu0 %v2088
        %v2090 = vpop.xlane.xlu0 %2089
        %v2091 = vsel %vm862, %v2081, 0.0
        %2092 = vadd.xlane.f32.xlu0 %v2091
        %v2093 = vpop.xlane.xlu0 %2092
        %v2094 = vsel %vm862, %v2082, 0.0
        %2095 = vadd.xlane.f32.xlu0 %v2094
        %v2096 = vpop.xlane.xlu0 %2095
        %v2097 = vrcp.pop 64.0
        %v2098 = vmul.f32 %v2087, %v2097
        %v2099 = vmul.f32 %v2090, %v2097
        %v2100 = vmul.f32 %v2093, %v2097
        %v2101 = vmul.f32 %v2096, %v2097
        %v2102 = vsub.f32 %v2079, %v2098
        %v2103 = vsub.f32 %v2080, %v2099
        %v2104 = vsub.f32 %v2081, %v2100
        %v2105 = vsub.f32 %v2082, %v2101
        %v2106 = vmul.f32 %v2102, %v2102
        %v2107 = vmul.f32 %v2103, %v2103
        %v2108 = vmul.f32 %v2104, %v2104
        %v2109 = vmul.f32 %v2105, %v2105
        %v2110 = vsel %vm862, %v2106, 0.0
        %2111 = vadd.xlane.f32.xlu0 %v2110
        %v2112 = vpop.xlane.xlu0 %2111
        %v2113 = vsel %vm862, %v2107, 0.0
        %2114 = vadd.xlane.f32.xlu0 %v2113
        %v2115 = vpop.xlane.xlu0 %2114
        %v2116 = vsel %vm862, %v2108, 0.0
        %2117 = vadd.xlane.f32.xlu0 %v2116
        %v2118 = vpop.xlane.xlu0 %2117
        %v2119 = vsel %vm862, %v2109, 0.0
        %2120 = vadd.xlane.f32.xlu0 %v2119
        %v2121 = vpop.xlane.xlu0 %2120
        %v2122 = vmul.f32 %v2112, %v2097
        %v2123 = vmul.f32 %v2115, %v2097
        %v2124 = vmul.f32 %v2118, %v2097
        %v2125 = vmul.f32 %v2121, %v2097
        %v2126 = vadd.f32 %v2122, 1e-05
        %v2127 = vadd.f32 %v2123, 1e-05
        %v2128 = vadd.f32 %v2124, 1e-05
        %v2129 = vadd.f32 %v2125, 1e-05
        %v2130 = vrsqrt.pop %v2126
        %v2131 = vrsqrt.pop %v2127
        %v2132 = vrsqrt.pop %v2128
        %v2133 = vrsqrt.pop %v2129
        %v2134 = vmul.f32 %v2102, %v2130
        %v2135 = vmul.f32 %v2103, %v2131
        %v2136 = vmul.f32 %v2104, %v2132
        %v2137 = vmul.f32 %v2105, %v2133
        %v2139 = vlaneseq
        %v2140 = vshrl.u32 %v2139, 7
        %v2141 = vsub.s32 0, %v2140
        %v2142 = vrot.slane %v2083, %v2141
        %v2144 = vmul.f32 %v2134, %v2142
        %v2145 = vmul.f32 %v2135, %v2142
        %v2146 = vmul.f32 %v2136, %v2142
        %v2147 = vmul.f32 %v2137, %v2142
        %v2149 = vlaneseq
        %v2150 = vshrl.u32 %v2149, 7
        %v2151 = vsub.s32 0, %v2150
        %v2152 = vrot.slane %v2084, %v2151
        %v2154 = vadd.f32 %v2144, %v2152
        %v2155 = vadd.f32 %v2145, %v2152
        %v2156 = vadd.f32 %v2146, %v2152
        %v2157 = vadd.f32 %v2147, %v2152
        %v2158 = vld [vmem:[%s634] sm:$0xf]
        %v2159 = vld [vmem:[%s634 + $0x4] sm:$0xf]
        %v2160 = vld [vmem:[%s634 + $0x8] sm:$0xf]
        %v2161 = vld [vmem:[%s634 + $0xc] sm:$0xf]
        %v2162 = vld [vmem:[%s634 + $0x10] sm:$0xf]
        %v2163 = vld [vmem:[%s634 + $0x14] sm:$0xf]
        %v2164 = vld [vmem:[%s634 + $0x18] sm:$0xf]
        %v2165 = vld [vmem:[%s634 + $0x1c] sm:$0xf]
        %v2166 = vpack.c.bf16 %v2155, %v2154
        %v2167 = vpack.c.bf16 %v2157, %v2156
        %v2168 = vld [vmem:[%s754] sm:$0x1]
        %v2170 = vlaneseq
        %v2171 = vshrl.u32 %v2170, 7
        %v2172 = vsub.s32 0, %v2171
        %v2173 = vrot.slane %v2168, %v2172
        %v2183 = vunpack.c.l.b16 %v2158
        %v2184 = vunpack.c.l.b16 %v2159
        %v2185 = vunpack.c.l.b16 %v2160
        %v2186 = vunpack.c.l.b16 %v2161
        %v2187 = vunpack.c.l.b16 %v2162
        %v2188 = vunpack.c.l.b16 %v2163
        %v2189 = vunpack.c.l.b16 %v2164
        %v2190 = vunpack.c.l.b16 %v2165
        %v2191 = vpack.c.b16 %v2184, %v2183
        %v2192 = vpack.c.b16 %v2186, %v2185
        %v2193 = vpack.c.b16 %v2188, %v2187
        %v2194 = vpack.c.b16 %v2190, %v2189
        %v2200 = vsel %vm862, %v2166, 0
        %v2203 = vsel %vm862, %v2167, 0
        %2205 = vmatprep.subr.bf16.mxu0 0
        %2206 = vmatpush1.bf16.msra.mxu0 %v2191
        %2207 = vmatprep.subr.bf16.mxu0 0
        %2208 = vmatpush1.bf16.msra.mxu0 %v2192
        %2209 = vmatprep.subr.bf16.mxu0 0
        %2210 = vmatpush1.bf16.msra.mxu0 %v2193
        %2211 = vmatprep.subr.bf16.mxu0 0
        %2212 = vmatpush1.bf16.msra.mxu0 %v2194
        %2213 = vmatprep.subr.bf16.mxu0 0
        %2214 = vmatpush1.bf16.msra.mxu0 0
        %2215 = vmatprep.subr.bf16.mxu0 0
        %2216 = vmatpush1.bf16.msra.mxu0 0
        %2217 = vmatprep.subr.bf16.mxu0 0
        %2218 = vmatpush1.bf16.msra.mxu0 0
        %2219 = vmatprep.subr.bf16.mxu0 0
        %2220 = vmatpush1.bf16.msra.mxu0 0
        %2221 = vmatprep.subr.bf16.mxu0 0
        %2222 = vmatpush1.bf16.msra.mxu0 0
        %2223 = vmatprep.subr.bf16.mxu0 0
        %2224 = vmatpush1.bf16.msra.mxu0 0
        %2225 = vmatprep.subr.bf16.mxu0 0
        %2226 = vmatpush1.bf16.msra.mxu0 0
        %2227 = vmatprep.subr.bf16.mxu0 0
        %2228 = vmatpush1.bf16.msra.mxu0 0
        %2229 = vmatprep.subr.bf16.mxu0 0
        %2230 = vmatpush1.bf16.msra.mxu0 0
        %2231 = vmatprep.subr.bf16.mxu0 0
        %2232 = vmatpush1.bf16.msra.mxu0 0
        %2233 = vmatprep.subr.bf16.mxu0 0
        %2234 = vmatpush1.bf16.msra.mxu0 0
        %2235 = vmatprep.subr.bf16.mxu0 0
        %2236 = vmatpush1.bf16.msra.mxu0 0
        %2237 = vmatprep.mubr.bf16.mxu0 0
        %2238 = vmatmul.mubr.bf16.gmra.mrb[0].mxu0 %v2200
        %v2239 = vpop.f32.mrb[0].mxu0
        %v2240 = vadd.f32 %v2173, %v2239
        %v2241 = vpop.f32.mrb[0].mxu0
        %v2242 = vpop.f32.mrb[0].mxu0
        %v2243 = vadd.f32 %v2173, %v2242
        %v2244 = vpop.f32.mrb[0].mxu0
        %2245 = vmatprep.mubr.bf16.mxu0 0
        %2246 = vmatmul.mubr.bf16.gmra.mrb[0].mxu0 %v2203
        %v2247 = vpop.f32.mrb[0].mxu0
        %v2248 = vadd.f32 %v2173, %v2247
        %v2249 = vpop.f32.mrb[0].mxu0
        %v2250 = vpop.f32.mrb[0].mxu0
        %v2251 = vadd.f32 %v2173, %v2250
        %v2252 = vpop.f32.mrb[0].mxu0
        %2253 = vdwg.mxu0
        %v2254 = vmax.f32 %v2240, 0.0
        %v2255 = vmax.f32 %v2243, 0.0
        %v2256 = vmax.f32 %v2248, 0.0
        %v2257 = vmax.f32 %v2251, 0.0
        %v2258 = vld [vmem:[%s759] sm:$0xf]
        %v2259 = vld [vmem:[%s759 + $0x4] sm:$0xf]
        %v2260 = vld [vmem:[%s759 + $0x8] sm:$0xf]
        %v2261 = vld [vmem:[%s759 + $0xc] sm:$0xf]
        %v2262 = vld [vmem:[%s759 + $0x10] sm:$0xf]
        %v2263 = vld [vmem:[%s759 + $0x14] sm:$0xf]
        %v2264 = vld [vmem:[%s759 + $0x18] sm:$0xf]
        %v2265 = vld [vmem:[%s759 + $0x1c] sm:$0xf]
        %v2266 = vld [vmem:[%s759 + $0x20] sm:$0xf]
        %v2267 = vld [vmem:[%s759 + $0x24] sm:$0xf]
        %v2268 = vld [vmem:[%s759 + $0x28] sm:$0xf]
        %v2269 = vld [vmem:[%s759 + $0x2c] sm:$0xf]
        %v2270 = vld [vmem:[%s759 + $0x30] sm:$0xf]
        %v2271 = vld [vmem:[%s759 + $0x34] sm:$0xf]
        %v2272 = vld [vmem:[%s759 + $0x38] sm:$0xf]
        %v2273 = vld [vmem:[%s759 + $0x3c] sm:$0xf]
        %v2274 = vpack.c.bf16 %v2255, %v2254
        %v2275 = vpack.c.bf16 %v2257, %v2256
        %v2276 = vld [vmem:[%s762] sm:$0x1]
        %v2278 = vlaneseq
        %v2279 = vshrl.u32 %v2278, 7
        %v2280 = vsub.s32 0, %v2279
        %v2281 = vrot.slane %v2276, %v2280
        %v2299 = vunpack.c.l.b16 %v2258
        %v2300 = vunpack.c.l.b16 %v2259
        %v2301 = vunpack.c.l.b16 %v2260
        %v2302 = vunpack.c.l.b16 %v2261
        %v2303 = vunpack.c.l.b16 %v2262
        %v2304 = vunpack.c.l.b16 %v2263
        %v2305 = vunpack.c.l.b16 %v2264
        %v2306 = vunpack.c.l.b16 %v2265
        %v2307 = vunpack.c.l.b16 %v2266
        %v2308 = vunpack.c.l.b16 %v2267
        %v2309 = vunpack.c.l.b16 %v2268
        %v2310 = vunpack.c.l.b16 %v2269
        %v2311 = vunpack.c.l.b16 %v2270
        %v2312 = vunpack.c.l.b16 %v2271
        %v2313 = vunpack.c.l.b16 %v2272
        %v2314 = vunpack.c.l.b16 %v2273
        %v2315 = vpack.c.b16 %v2300, %v2299
        %v2316 = vpack.c.b16 %v2302, %v2301
        %v2317 = vpack.c.b16 %v2304, %v2303
        %v2318 = vpack.c.b16 %v2306, %v2305
        %v2319 = vpack.c.b16 %v2308, %v2307
        %v2320 = vpack.c.b16 %v2310, %v2309
        %v2321 = vpack.c.b16 %v2312, %v2311
        %v2322 = vpack.c.b16 %v2314, %v2313
        %2331 = vmatprep.subr.bf16.mxu0 0
        %2332 = vmatpush1.bf16.msra.mxu0 %v2315
        %2333 = vmatprep.subr.bf16.mxu0 0
        %2334 = vmatpush1.bf16.msra.mxu0 %v2316
        %2335 = vmatprep.subr.bf16.mxu0 0
        %2336 = vmatpush1.bf16.msra.mxu0 %v2317
        %2337 = vmatprep.subr.bf16.mxu0 0
        %2338 = vmatpush1.bf16.msra.mxu0 %v2318
        %2339 = vmatprep.subr.bf16.mxu0 0
        %2340 = vmatpush1.bf16.msra.mxu0 %v2319
        %2341 = vmatprep.subr.bf16.mxu0 0
        %2342 = vmatpush1.bf16.msra.mxu0 %v2320
        %2343 = vmatprep.subr.bf16.mxu0 0
        %2344 = vmatpush1.bf16.msra.mxu0 %v2321
        %2345 = vmatprep.subr.bf16.mxu0 0
        %2346 = vmatpush1.bf16.msra.mxu0 %v2322
        %2347 = vmatprep.subr.bf16.mxu0 0
        %2348 = vmatpush1.bf16.msra.mxu0 0
        %2349 = vmatprep.subr.bf16.mxu0 0
        %2350 = vmatpush1.bf16.msra.mxu0 0
        %2351 = vmatprep.subr.bf16.mxu0 0
        %2352 = vmatpush1.bf16.msra.mxu0 0
        %2353 = vmatprep.subr.bf16.mxu0 0
        %2354 = vmatpush1.bf16.msra.mxu0 0
        %2355 = vmatprep.subr.bf16.mxu0 0
        %2356 = vmatpush1.bf16.msra.mxu0 0
        %2357 = vmatprep.subr.bf16.mxu0 0
        %2358 = vmatpush1.bf16.msra.mxu0 0
        %2359 = vmatprep.subr.bf16.mxu0 0
        %2360 = vmatpush1.bf16.msra.mxu0 0
        %2361 = vmatprep.subr.bf16.mxu0 0
        %2362 = vmatpush1.bf16.msra.mxu0 0
        %2363 = vmatprep.mubr.bf16.mxu0 0
        %2364 = vmatmul.mubr.bf16.gmra.mrb[0].mxu0 %v2274
        %v2365 = vpop.f32.mrb[0].mxu0
        %v2366 = vadd.f32 %v2281, %v2365
        %v2367 = vpop.f32.mrb[0].mxu0
        %v2368 = vpop.f32.mrb[0].mxu0
        %v2369 = vadd.f32 %v2281, %v2368
        %v2370 = vpop.f32.mrb[0].mxu0
        %2371 = vmatprep.mubr.bf16.mxu0 0
        %2372 = vmatmul.mubr.bf16.gmra.mrb[0].mxu0 %v2275
        %v2373 = vpop.f32.mrb[0].mxu0
        %v2374 = vadd.f32 %v2281, %v2373
        %v2375 = vpop.f32.mrb[0].mxu0
        %v2376 = vpop.f32.mrb[0].mxu0
        %v2377 = vadd.f32 %v2281, %v2376
        %v2378 = vpop.f32.mrb[0].mxu0
        %2379 = vdwg.mxu0
        %v2380 = vadd.f32 %v2154, %v2366
        %v2381 = vadd.f32 %v2155, %v2369
        %v2382 = vadd.f32 %v2156, %v2374
        %v2383 = vadd.f32 %v2157, %v2377
        %v2384 = vld [vmem:[%s765] sm:$0x1]
        %v2385 = vld [vmem:[%s768] sm:$0x1]
        %v2386 = vsel %vm862, %v2380, 0.0
        %2387 = vadd.xlane.f32.xlu0 %v2386
        %v2388 = vpop.xlane.xlu0 %2387
        %v2389 = vsel %vm862, %v2381, 0.0
        %2390 = vadd.xlane.f32.xlu0 %v2389
        %v2391 = vpop.xlane.xlu0 %2390
        %v2392 = vsel %vm862, %v2382, 0.0
        %2393 = vadd.xlane.f32.xlu0 %v2392
        %v2394 = vpop.xlane.xlu0 %2393
        %v2395 = vsel %vm862, %v2383, 0.0
        %2396 = vadd.xlane.f32.xlu0 %v2395
        %v2397 = vpop.xlane.xlu0 %2396
        %v2398 = vmul.f32 %v2388, %v2097
        %v2399 = vmul.f32 %v2391, %v2097
        %v2400 = vmul.f32 %v2394, %v2097
        %v2401 = vmul.f32 %v2397, %v2097
        %v2402 = vsub.f32 %v2380, %v2398
        %v2403 = vsub.f32 %v2381, %v2399
        %v2404 = vsub.f32 %v2382, %v2400
        %v2405 = vsub.f32 %v2383, %v2401
        %v2406 = vmul.f32 %v2402, %v2402
        %v2407 = vmul.f32 %v2403, %v2403
        %v2408 = vmul.f32 %v2404, %v2404
        %v2409 = vmul.f32 %v2405, %v2405
        %v2410 = vsel %vm862, %v2406, 0.0
        %2411 = vadd.xlane.f32.xlu0 %v2410
        %v2412 = vpop.xlane.xlu0 %2411
        %v2413 = vsel %vm862, %v2407, 0.0
        %2414 = vadd.xlane.f32.xlu0 %v2413
        %v2415 = vpop.xlane.xlu0 %2414
        %v2416 = vsel %vm862, %v2408, 0.0
        %2417 = vadd.xlane.f32.xlu0 %v2416
        %v2418 = vpop.xlane.xlu0 %2417
        %v2419 = vsel %vm862, %v2409, 0.0
        %2420 = vadd.xlane.f32.xlu0 %v2419
        %v2421 = vpop.xlane.xlu0 %2420
        %v2422 = vmul.f32 %v2412, %v2097
        %v2423 = vmul.f32 %v2415, %v2097
        %v2424 = vmul.f32 %v2418, %v2097
        %v2425 = vmul.f32 %v2421, %v2097
        %v2426 = vadd.f32 %v2422, 1e-05
        %v2427 = vadd.f32 %v2423, 1e-05
        %v2428 = vadd.f32 %v2424, 1e-05
        %v2429 = vadd.f32 %v2425, 1e-05
        %v2430 = vrsqrt.pop %v2426
        %v2431 = vrsqrt.pop %v2427
        %v2432 = vrsqrt.pop %v2428
        %v2433 = vrsqrt.pop %v2429
        %v2434 = vmul.f32 %v2402, %v2430
        %v2435 = vmul.f32 %v2403, %v2431
        %v2436 = vmul.f32 %v2404, %v2432
        %v2437 = vmul.f32 %v2405, %v2433
        %v2439 = vlaneseq
        %v2440 = vshrl.u32 %v2439, 7
        %v2441 = vsub.s32 0, %v2440
        %v2442 = vrot.slane %v2384, %v2441
        %v2444 = vmul.f32 %v2434, %v2442
        %v2445 = vmul.f32 %v2435, %v2442
        %v2446 = vmul.f32 %v2436, %v2442
        %v2447 = vmul.f32 %v2437, %v2442
        %v2449 = vlaneseq
        %v2450 = vshrl.u32 %v2449, 7
        %v2451 = vsub.s32 0, %v2450
        %v2452 = vrot.slane %v2385, %v2451
        %v2454 = vadd.f32 %v2444, %v2452
        %v2455 = vadd.f32 %v2445, %v2452
        %v2456 = vadd.f32 %v2446, %v2452
        %v2457 = vadd.f32 %v2447, %v2452
        %2458 = vst.msk [vmem:[#allocation2] sm:$0xff] %vm862, %v2454
        %2459 = vst.msk [vmem:[#allocation2 + $0x8] sm:$0xff] %vm862, %v2455
        %2460 = vst.msk [vmem:[#allocation2 + $0x10] sm:$0xff] %vm862, %v2456
        %2461 = vst.msk [vmem:[#allocation2 + $0x18] sm:$0xff] %vm862, %v2457
        %p2462 = scmp.eq.s32.totalorder %s36, 1
        // Predicated region
        $region101: #{tpu_custom_call.1} parent=79 // pred_check
          %p2463 = pneg %p2462
        $region102: #{tpu_custom_call.1} parent=79 // pred_check_branch
          %2465 = sbr.rel (%p2463) target = $region104
        $region103: #{tpu_custom_call.1} parent=79 // pred_region
          %v2466 = vpack.c.bf16 %v2455, %v2454
          %v2467 = vpack.c.bf16 %v2457, %v2456
          %v2470 = vunpack.c.l.b16 %v2466
          %v2471 = vunpack.c.h.b16 %v2466
          %v2472 = vunpack.c.l.b16 %v2467
          %v2473 = vunpack.c.h.b16 %v2467
          %v2474 = vpack.c.b16 %v2470, %v2470
          %v2475 = vpack.c.b16 %v2471, %v2471
          %v2476 = vpack.c.b16 %v2472, %v2472
          %v2477 = vpack.c.b16 %v2473, %v2473
          %vm2482 = vcmask 519168
          %2483 = vst.msk [vmem:[%s726] sm:$0xf] %vm2482, %v2474
          %2484 = vst.msk [vmem:[%s726 + $0x4] sm:$0xf] %vm2482, %v2475
          %2485 = vst.msk [vmem:[%s726 + $0x8] sm:$0xf] %vm2482, %v2476
          %2486 = vst.msk [vmem:[%s726 + $0xc] sm:$0xf] %vm2482, %v2477
        $region104: #{tpu_custom_call.1} parent=79 // pred_fallthru
          _
        %s2487 = sand.u32 %s431, 1
        %s2488 = scalar_lea.sflag [#allocation5], %s2487
        %s2489 = sand.u32 %s431, 1
        %s2490 = smul.addr %s2489, 16
        %s2491 = scalar_lea.vmem [#allocation10], %s2490
        // Predicated region
        $region105: #{tpu_custom_call.1} parent=79 // pred_check
          %p2492 = pneg %p441
        $region106: #{tpu_custom_call.1} parent=79 // pred_check_branch
          %2494 = sbr.rel (%p2492) target = $region108
        $region107: #{tpu_custom_call.1} parent=79 // pred_region
          %s2495 = smul.u32 2, %s35
          %s2497 = ssub.s32 256, 256
          %2498 = vsyncadd %s2488, %s2497
          %s2499 = smul.addr %s2495, 2
          %s2500 = smul.addr %s2499, 64
          %s2501 = scalar_lea.hbm %s15, %s2500
          %s2502 = sshll.u32 %s2491, 4
          %s2503 = int_to_ptr.vmem [resolvable:$true] %s2502
          %2508 = dma.vmem_to_hbm [thread:$0]  %s2503, 256, %s2501, %s2488, 64, 64, 4
        $region108: #{tpu_custom_call.1} parent=79 // pred_fallthru
          _
      $region80: #{tpu_custom_call.1} parent=5 // pred_fallthru
        _
      %p2509 = scmp.le.s32.totalorder 2, %s26
      // Predicated region
      $region109: #{tpu_custom_call.1} parent=5 // pred_check
        %p2510 = pneg %p2509
      $region110: #{tpu_custom_call.1} parent=5 // pred_check_branch
        %2512 = sbr.rel (%p2510) target = $region112
      $region111: #{tpu_custom_call.1} parent=5 // pred_region
        %s2513 = ssub.s32 %s26, 2
        // Predicated region
        $region113: #{tpu_custom_call.1} parent=111 // pred_check
          %p2514 = pneg %p447
        $region114: #{tpu_custom_call.1} parent=111 // pred_check_branch
          %2516 = sbr.rel (%p2514) target = $region116
        $region115: #{tpu_custom_call.1} parent=111 // pred_region
          %s2517 = sand.u32 %s432, 1
          %s2518 = scalar_lea.sflag [#allocation5], %s2517
          %s2519 = sand.u32 %s432, 1
          %s2520 = smul.addr %s2519, 16
          %s2521 = scalar_lea.vmem [#allocation10], %s2520
          %2522 = dma.done %s2518, 256
        $region116: #{tpu_custom_call.1} parent=111 // pred_fallthru
          _
      $region112: #{tpu_custom_call.1} parent=5 // pred_fallthru
        _
    $region6: #{tpu_custom_call.1} parent=1 // loop_footer
      %s30 = sadd.s32 1, %s26
    $region7: #{tpu_custom_call.1} parent=1 // loop_footer_branch
      %25 = sbr.rel target = $region3
    $region8: #{tpu_custom_call.1} parent=1 // loop_exit
      _
    %2523 = vsyncpa [#allocation4], 1
    %s2524 = scalar_lea.sflag [#allocation4], 1
    %2525 = vsyncpa %s2524, 1
    %2526 = vsyncpa [#allocation7], 1
    %2527 = vsyncpa [#allocation5], 1
    %s2528 = scalar_lea.sflag [#allocation5], 1
    %2529 = vsyncpa %s2528, 1

</llo_original>
